<compile_context>
chip_gen: v7x
topology: tpu7x:2x2x1
jax: 0.10.0
libtpu: 0.0.40
codegen_flags: <defaults>
</compile_context>

<pallas_src>
import functools
import math

import jax
import jax.numpy as jnp
from jax.experimental import pallas as pl
from jax.experimental.pallas import tpu as pltpu


# --------------------------------------------------------------------------
# Implicit-GEMM convolution kernel (stride-1 "valid" conv on a pre-padded,
# flattened NHWC image).  Output rows live on the padded width `win`; columns
# [wo, win) of each output row are junk and are sliced off outside.
# Optionally fuses (a) the residual add + ReLU and (b) the block's 1x1/s2
# downsample conv (second output) into the same kernel.
# --------------------------------------------------------------------------

def _conv_taps_kernel(*refs, tap_offsets, m_rows, relu, fuse_add, fuse_ds, q):
    i = 0
    x_ref = refs[i]; i += 1
    w_ref = refs[i]; i += 1
    b_ref = refs[i]; i += 1
    if fuse_add:
        id_ref = refs[i]; i += 1
    if fuse_ds:
        dsw_ref = refs[i]; i += 1
        dsb_ref = refs[i]; i += 1
    o_ref = refs[i]; i += 1
    if fuse_ds:
        ods_ref = refs[i]; i += 1
    acc_ref = refs[i]

    # Tap loop: accumulate KH*KW small matmuls into an f32 VMEM scratch.
    # First tap assigns (no zero-init pass); "+=" lets v7x accumulate in the MRB.
    for t, off in enumerate(tap_offsets):
        lhs = x_ref[0, pl.ds(off, m_rows), :]
        part = jnp.dot(lhs, w_ref[t], preferred_element_type=jnp.float32)
        if t == 0:
            acc_ref[...] = part
        else:
            acc_ref[...] += part

    r = acc_ref[...] + b_ref[...]                       # folded-BN shift, f32
    if fuse_add:                                        # fused residual add
        r = r + id_ref[0, pl.ds(0, m_rows), :].astype(jnp.float32)
    if relu:
        r = jnp.maximum(r, 0.0)
    o_ref[0, pl.ds(0, m_rows), :] = r.astype(o_ref.dtype)

    if fuse_ds:
        # Fused 1x1/stride-2 downsample: its input is the (u,v)=(1,1) space-to-depth
        # quadrant = channels [3q, 4q) of the folded image at the same rows as the
        # main conv's outputs (LHS already resident in VMEM).  No ReLU on this path.
        lhs_ds = x_ref[0, pl.ds(0, m_rows), pl.ds(3 * q, q)]
        ds = jnp.dot(lhs_ds, dsw_ref[...], preferred_element_type=jnp.float32)
        ds = ds + dsb_ref[...]
        ods_ref[0, pl.ds(0, m_rows), :] = ds.astype(ods_ref.dtype)


def conv_taps(x_flat, w_taps, bias, *, win, kh, kw, ho, wo, relu,
              identity_flat=None, ds_w=None, ds_b=None):
    """x_flat: (N, Hin*Win, Cin) bf16 pre-padded image, flattened over space.
    w_taps : (KH*KW, Cin, Cout) bf16, BN-scale folded.  bias: (1, Cout) f32."""
    N, L, cin = x_flat.shape
    T, _, cout = w_taps.shape
    m_rows = (ho - 1) * win + wo              # valid padded-width output rows
    rows_out = ho * win                       # output buffer rows (tail = junk)
    tn = 256 if cout % 256 == 0 else cout
    n_j = cout // tn
    tap_offsets = tuple(a * win + b for a in range(kh) for b in range(kw))
    fuse_add = identity_flat is not None
    fuse_ds = ds_w is not None
    q = cin // 4 if fuse_ds else 0

    # grid = (cout_tiles, batch): weight slab (index depends only on j) stays
    # resident across the inner batch axis.
    in_specs = [
        pl.BlockSpec((1, L, cin), lambda j, n: (n, 0, 0)),      # whole image
        pl.BlockSpec((T, cin, tn), lambda j, n: (0, 0, j)),     # weight slab
        pl.BlockSpec((1, tn), lambda j, n: (0, j)),             # bias
    ]
    args = [x_flat, w_taps, bias]
    if fuse_add:
        in_specs.append(pl.BlockSpec((1, rows_out, tn), lambda j, n: (n, 0, j)))
        args.append(identity_flat)
    if fuse_ds:
        in_specs.append(pl.BlockSpec((q, tn), lambda j, n: (0, j)))
        in_specs.append(pl.BlockSpec((1, tn), lambda j, n: (0, j)))
        args += [ds_w, ds_b]

    out_block = pl.BlockSpec((1, rows_out, tn), lambda j, n: (n, 0, j))
    if fuse_ds:
        out_shape = (jax.ShapeDtypeStruct((N, rows_out, cout), jnp.bfloat16),
                     jax.ShapeDtypeStruct((N, rows_out, cout), jnp.bfloat16))
        out_specs = (out_block, out_block)
    else:
        out_shape = jax.ShapeDtypeStruct((N, rows_out, cout), jnp.bfloat16)
        out_specs = out_block

    kernel = functools.partial(
        _conv_taps_kernel, tap_offsets=tap_offsets, m_rows=m_rows,
        relu=relu, fuse_add=fuse_add, fuse_ds=fuse_ds, q=q)

    return pl.pallas_call(
        kernel,
        out_shape=out_shape,
        grid_spec=pltpu.PrefetchScalarGridSpec(
            num_scalar_prefetch=0,
            grid=(n_j, N),
            in_specs=in_specs,
            out_specs=out_specs,
            scratch_shapes=[pltpu.VMEM((m_rows, tn), jnp.float32)],
        ),
        compiler_params=pltpu.CompilerParams(
            dimension_semantics=("parallel", "parallel")),
    )(*args)


# --------------------------------------------------------------------------
# Tiled matmul + bias (used by the 7x7 stem GEMM).  Full-K blocks, bf16 operands,
# f32 MXU accumulation.
# --------------------------------------------------------------------------

def _matmul_bias_kernel(a_ref, b_ref, bias_ref, o_ref, *, relu):
    r = jnp.dot(a_ref[...], b_ref[...],
                preferred_element_type=jnp.float32) + bias_ref[...]
    if relu:
        r = jnp.maximum(r, 0.0)
    o_ref[...] = r.astype(o_ref.dtype)


def matmul_bias(a, b, bias, *, relu):
    """a:(M,K) bf16, b:(K,Cout) bf16, bias:(1,Cout) f32."""
    M, K = a.shape
    _, Nc = b.shape
    tn = 256 if Nc % 256 == 0 else Nc
    tm = None
    for cand in (256, 128):
        if M % cand == 0:
            tm = cand
            break
    if tm is None:
        if M <= 1024:
            tm = M
        else:
            tm = 128
            a = jnp.pad(a, ((0, (-M) % 128), (0, 0)))
    Mp = a.shape[0]
    out = pl.pallas_call(
        functools.partial(_matmul_bias_kernel, relu=relu),
        out_shape=jax.ShapeDtypeStruct((Mp, Nc), jnp.bfloat16),
        grid_spec=pltpu.PrefetchScalarGridSpec(
            num_scalar_prefetch=0,
            grid=(Mp // tm, Nc // tn),
            in_specs=[pl.BlockSpec((tm, K), lambda i, j: (i, 0)),
                      pl.BlockSpec((K, tn), lambda i, j: (0, j)),
                      pl.BlockSpec((1, tn), lambda i, j: (0, j))],
            out_specs=pl.BlockSpec((tm, tn), lambda i, j: (i, j)),
        ),
        compiler_params=pltpu.CompilerParams(
            dimension_semantics=("parallel", "parallel")),
    )(a, b, bias)
    return out if Mp == M else out[:M]


# --------------------------------------------------------------------------
# Fused tail: global average pool -> fc -> l2-norm -> *alpha (one small kernel)
# --------------------------------------------------------------------------

def _tail_kernel(x_ref, w_ref, b_ref, o_ref, *, alpha):
    x = x_ref[...].astype(jnp.float32)                    # (N, H*W, 512)
    pooled = jnp.mean(x, axis=1)                          # AdaptiveAvgPool2d((1,1))
    emb = jnp.dot(pooled, w_ref[...],
                  preferred_element_type=jnp.float32) + b_ref[...]
    normp = jnp.sum(emb * emb, axis=1, keepdims=True) + 1e-10
    o_ref[...] = (emb / jnp.sqrt(normp)) * alpha


def tail_pool_fc_l2norm(x3, fc_w, fc_b, *, alpha):
    N = x3.shape[0]
    E = fc_w.shape[1]
    return pl.pallas_call(
        functools.partial(_tail_kernel, alpha=alpha),
        out_shape=jax.ShapeDtypeStruct((N, E), jnp.float32),
    )(x3, fc_w, fc_b)


# --------------------------------------------------------------------------
# MaxPool2d(3, stride=2, padding=1) -- reduce_window avoids the explicit -inf
# pad copy of the (largest) stem feature map.
# --------------------------------------------------------------------------

def maxpool_3x3_s2_p1(x):
    return jax.lax.reduce_window(
        x, jnp.array(-jnp.inf, dtype=x.dtype), jax.lax.max,
        window_dimensions=(1, 3, 3, 1), window_strides=(1, 2, 2, 1),
        padding=((0, 0), (1, 1), (1, 1), (0, 0)))


# --------------------------------------------------------------------------
# Conv (+ folded eval-mode BN, + optional fused residual / downsample) wrapper
# --------------------------------------------------------------------------

def conv_bn_apply(x, p, *, relu, identity=None):
    """x: NHWC bf16.  p: pre-laid-out params produced by init_params."""
    N, H, W, C = x.shape

    if p["kind"] == "stem":                    # 7x7/s2 stem as one dense GEMM (K=147)
        pad, k = p["pad"], p["k"]
        xp = jnp.pad(x, ((0, 0), (pad, pad), (pad, pad), (0, 0)))
        ho = (H + 2 * pad - k) // 2 + 1
        wo = (W + 2 * pad - k) // 2 + 1
        cols = [xp[:, i:i + 2 * ho:2, j:j + 2 * wo:2, :]
                for i in range(k) for j in range(k)]
        patches = jnp.concatenate(cols, axis=-1)            # (N, ho, wo, k*k*C)
        out = matmul_bias(patches.reshape(N * ho * wo, k * k * C),
                          p["w"], p["b"], relu=relu)
        return out.reshape(N, ho, wo, -1)

    # implicit-GEMM 3x3 conv (stride-1 direct, or stride-2 via space-to-depth fold)
    pad, kh, kw = p["pad"], p["kh"], p["kw"]
    xp = jnp.pad(x, ((0, 0), (pad, pad), (pad, pad), (0, 0)))
    if p["factor"] == 2:                       # stride-2: space-to-depth fold
        _, Hp, Wp, _ = xp.shape
        xp = xp.reshape(N, Hp // 2, 2, Wp // 2, 2, C)
        xp = xp.transpose(0, 1, 3, 2, 4, 5).reshape(N, Hp // 2, Wp // 2, 4 * C)
    _, hin, win, cin = xp.shape
    ho, wo = hin - kh + 1, win - kw + 1
    x_flat = xp.reshape(N, hin * win, cin)
    cout = p["w"].shape[2]

    id_flat = None
    if identity is not None:                   # lay residual out on padded width
        idp = jnp.pad(identity.astype(jnp.bfloat16),
                      ((0, 0), (0, 0), (0, win - wo), (0, 0)))
        id_flat = idp.reshape(N, ho * win, cout)

    out = conv_taps(x_flat, p["w"], p["b"], win=win, kh=kh, kw=kw,
                    ho=ho, wo=wo, relu=relu, identity_flat=id_flat,
                    ds_w=p.get("ds_w"), ds_b=p.get("ds_b"))

    def compact(o):                            # (N, ho*win, cout) -> (N, ho, wo, cout)
        return o.reshape(N, ho, win, cout)[:, :, :wo, :]

    if p.get("ds_w") is not None:
        main, dsid = out
        return compact(main), compact(dsid)
    return compact(out)


# --------------------------------------------------------------------------
# Deterministic parameter construction (synthetic weights; kernel layout + BN
# fold done once at init; f32 reference copies kept for validation).
# --------------------------------------------------------------------------

def conv_bn_params(key, cin, cout, k, stride):
    k_w, k_g, k_b, k_m, k_v = jax.random.split(key, 5)
    fan_in = cin * k * k
    w = jax.random.normal(k_w, (cout, cin, k, k), jnp.float32) / math.sqrt(fan_in)
    gamma = 1.0 + 0.1 * jax.random.normal(k_g, (cout,), jnp.float32)
    beta = 0.1 * jax.random.normal(k_b, (cout,), jnp.float32)
    rmean = 0.1 * jax.random.normal(k_m, (cout,), jnp.float32)
    rvar = 1.0 + 0.5 * jax.random.uniform(k_v, (cout,), jnp.float32)
    scale = gamma / jnp.sqrt(rvar + 1e-5)          # eval-mode BN fold
    shift = beta - rmean * scale
    wf = w * scale[:, None, None, None]
    b = shift.reshape(1, cout)

    p = {"ref_w": wf, "ref_b": shift, "stride": stride, "pad": k // 2, "k": k}
    if k == 7:                                     # stem: im2col GEMM, K = 7*7*cin
        p.update(kind="stem",
                 w=jnp.transpose(wf, (2, 3, 1, 0)).reshape(k * k * cin,
                                                           cout).astype(jnp.bfloat16),
                 b=b)
    elif k == 1:                                   # 1x1/s2 downsample (fused later)
        p.update(kind="ds",
                 w=wf.reshape(cout, cin).T.astype(jnp.bfloat16), b=b)
    elif stride == 1:                              # tap-major (KH*KW, Cin, Cout)
        w_taps = jnp.transpose(wf, (2, 3, 1, 0)).reshape(k * k, cin, cout)
        p.update(kind="imp", factor=1, kh=k, kw=k,
                 w=w_taps.astype(jnp.bfloat16), b=b)
    else:                                          # 3x3/s2 -> 2x2/s1 on s2d-folded input
        k2 = (k + 1) // 2
        wf_p = jnp.pad(wf, ((0, 0), (0, 0), (0, 2 * k2 - k), (0, 2 * k2 - k)))
        w_taps = wf_p.reshape(cout, cin, k2, 2, k2, 2)
        w_taps = w_taps.transpose(2, 4, 3, 5, 1, 0).reshape(k2 * k2, 4 * cin, cout)
        p.update(kind="imp", factor=2, kh=k2, kw=k2,
                 w=w_taps.astype(jnp.bfloat16), b=b)
    return p


def make_block(key, cin, cout, stride, with_downsample):
    kc1, kc2, kd = jax.random.split(key, 3)
    conv1 = conv_bn_params(kc1, cin, cout, 3, stride)
    conv2 = conv_bn_params(kc2, cout, cout, 3, 1)
    if with_downsample:                            # fuse 1x1/s2 downsample into conv1
        ds = conv_bn_params(kd, cin, cout, 1, 2)
        conv1["ds_w"], conv1["ds_b"] = ds["w"], ds["b"]
        conv1["ds_ref_w"], conv1["ds_ref_b"] = ds["ref_w"], ds["ref_b"]
    return {"conv1": conv1, "conv2": conv2}


def init_params(key, embedding_dimension=128):
    keys = jax.random.split(key, 16)
    params = {"conv1": conv_bn_params(keys[0], 3, 64, 7, 2)}
    chans = [64, 64, 128, 256, 512]
    ki = 1
    for li in range(1, 5):
        cin, cout = chans[li - 1], chans[li]
        stride = 1 if li == 1 else 2
        blocks = []
        for bi in range(2):
            s = stride if bi == 0 else 1
            with_ds = (bi == 0 and li != 1)
            blocks.append(make_block(keys[ki], cin if bi == 0 else cout,
                                     cout, s, with_ds))
            ki += 1
        params[f"layer{li}"] = blocks
    fc_w = jax.random.normal(keys[ki], (embedding_dimension, 512),
                             jnp.float32) / math.sqrt(512)
    fc_b = 0.1 * jax.random.normal(keys[ki + 1], (embedding_dimension,), jnp.float32)
    params["fc"] = (fc_w.T, fc_b.reshape(1, -1))   # (512, emb) pre-transposed, f32
    return params


# --------------------------------------------------------------------------
# ResNet-18 triplet forward
# --------------------------------------------------------------------------

def basic_block(x, bp):
    c1 = bp["conv1"]
    if "ds_w" in c1:                               # conv1 + fused 1x1/s2 downsample
        out, identity = conv_bn_apply(x, c1, relu=True)
    else:
        out = conv_bn_apply(x, c1, relu=True)
        identity = x
    # residual add + ReLU fused into conv2's epilogue
    return conv_bn_apply(out, bp["conv2"], relu=True, identity=identity)


def resnet18_triplet_forward(params, images_nchw, alpha=10.0):
    x = jnp.transpose(images_nchw, (0, 2, 3, 1)).astype(jnp.bfloat16)
    x = conv_bn_apply(x, params["conv1"], relu=True)        # 7x7/s2 stem GEMM
    x = maxpool_3x3_s2_p1(x)
    for li in range(1, 5):
        for bp in params[f"layer{li}"]:
            x = basic_block(x, bp)
    N, Hf, Wf, C = x.shape
    fc_w, fc_b = params["fc"]
    return tail_pool_fc_l2norm(x.reshape(N, Hf * Wf, C), fc_w, fc_b, alpha=alpha)


# --------------------------------------------------------------------------
# Pure-JAX reference for validating the conv paths
# --------------------------------------------------------------------------

def _ref_conv(x, w_oihw, bias, stride, pad, relu, identity=None):
    y = jax.lax.conv_general_dilated(
        x, jnp.transpose(w_oihw, (2, 3, 1, 0)),
        window_strides=(stride, stride), padding=[(pad, pad), (pad, pad)],
        dimension_numbers=("NHWC", "HWIO", "NHWC"))
    y = y + bias.reshape(1, 1, 1, -1)
    if identity is not None:
        y = y + identity
    return jnp.maximum(y, 0.0) if relu else y


if __name__ == "__main__":
    root = jax.random.PRNGKey(0)
    k_img, k_par, k_t1, k_t2, k_t3, k_x = jax.random.split(root, 6)

    def close(a, b, atol=0.1, rtol=0.05):
        a = a.astype(jnp.float32)
        b = b.astype(jnp.float32)
        return bool(jnp.all(jnp.abs(a - b) <= atol + rtol * jnp.abs(b)))

    # --- unit check 1: stride-1 3x3 conv + fused residual add + ReLU ---
    p1 = conv_bn_params(k_t1, 64, 64, 3, 1)
    xt = jax.random.normal(k_x, (2, 8, 8, 64), jnp.float32).astype(jnp.bfloat16)
    idt = jax.random.normal(k_t2, (2, 8, 8, 64), jnp.float32).astype(jnp.bfloat16)
    got = conv_bn_apply(xt, p1, relu=True, identity=idt)
    ref = _ref_conv(xt.astype(jnp.float32), p1["ref_w"], p1["ref_b"], 1, 1, True,
                    identity=idt.astype(jnp.float32))
    assert close(got, ref), "stride-1 conv mismatch"

    # --- unit check 2: stride-2 3x3 conv (s2d fold) with fused 1x1/s2 downsample ---
    blk = make_block(k_t3, 64, 128, 2, True)
    c1 = blk["conv1"]
    got_main, got_ds = conv_bn_apply(xt, c1, relu=True)
    ref_main = _ref_conv(xt.astype(jnp.float32), c1["ref_w"], c1["ref_b"], 2, 1, True)
    ref_ds = _ref_conv(xt.astype(jnp.float32), c1["ds_ref_w"], c1["ds_ref_b"],
                       2, 0, False)
    assert close(got_main, ref_main), "stride-2 conv mismatch"
    assert close(got_ds, ref_ds), "fused downsample mismatch"

    # --- unit check 3: 7x7/s2 stem GEMM ---
    ps = conv_bn_params(k_t2, 3, 64, 7, 2)
    xs = jax.random.normal(k_x, (2, 16, 16, 3), jnp.float32).astype(jnp.bfloat16)
    got_s = conv_bn_apply(xs, ps, relu=True)
    ref_s = _ref_conv(xs.astype(jnp.float32), ps["ref_w"], ps["ref_b"], 2, 3, True)
    assert close(got_s, ref_s), "stem conv mismatch"

    # --- full forward ---
    images = jax.random.normal(k_img, (2, 3, 64, 64), jnp.float32)
    params = init_params(k_par, embedding_dimension=128)
    fwd = jax.jit(functools.partial(resnet18_triplet_forward, params))
    emb = jax.block_until_ready(fwd(images))

    assert emb.shape == (2, 128) and emb.dtype == jnp.float32
    norms = jnp.sqrt(jnp.sum(emb * emb, axis=1))          # each row ~= alpha (=10)
    assert bool(jnp.all(jnp.abs(norms - 10.0) < 1e-2))
    print("KERNEL_OK")
</pallas_src>

<mosaic_0001>
module attributes {stable_mosaic.version = 11 : i64} {
  func.func @_conv_taps_kernel(%arg0: i32, %arg1: i32, %arg2: memref<1x100x64xbf16, #tpu.memory_space<vmem>>, %arg3: memref<9x64x64xbf16, #tpu.memory_space<vmem>>, %arg4: memref<1x64xf32, #tpu.memory_space<vmem>>, %arg5: memref<1x80x64xbf16, #tpu.memory_space<vmem>>, %arg6: memref<1x80x64xbf16, #tpu.memory_space<vmem>>, %arg7: memref<78x64xf32, #tpu.memory_space<vmem>>) attributes {dimension_semantics = [#tpu.dimension_semantics<parallel>, #tpu.dimension_semantics<parallel>], iteration_bounds = array<i64: 1, 2>, scalar_prefetch = 0 : i64, scratch_operands = 1 : i64, tpu.core_type = #tpu.core_type<tc>, window_params = [{transform_indices = @transform_0, window_bounds = array<i64: 1, 100, 64>}, {transform_indices = @transform_1, window_bounds = array<i64: 9, 64, 64>}, {transform_indices = @transform_2, window_bounds = array<i64: 1, 64>}, {transform_indices = @transform_3, window_bounds = array<i64: 1, 80, 64>}, {transform_indices = @transform_4, window_bounds = array<i64: 1, 80, 64>}]} {
    %c0 = arith.constant 0 : index
    %c0_0 = arith.constant 0 : index
    %c0_1 = arith.constant 0 : index
    %0 = vector.load %arg2[%c0, %c0_0, %c0_1] : memref<1x100x64xbf16, #tpu.memory_space<vmem>>, vector<1x78x64xbf16>
    %1 = vector.shape_cast %0 : vector<1x78x64xbf16> to vector<78x64xbf16>
    %c0_2 = arith.constant 0 : index
    %c0_3 = arith.constant 0 : index
    %c0_4 = arith.constant 0 : index
    %2 = vector.load %arg3[%c0_2, %c0_3, %c0_4] : memref<9x64x64xbf16, #tpu.memory_space<vmem>>, vector<1x64x64xbf16>
    %3 = vector.shape_cast %2 : vector<1x64x64xbf16> to vector<64x64xbf16>
    %cst = arith.constant dense<0.000000e+00> : vector<78x64xf32>
    %4 = tpu.matmul %1, %3, %cst {dimension_numbers = #tpu.dot_dimension_numbers<[1], [0], [0], [1], [0, 0, 1, 1], [], []>} : vector<78x64xbf16>, vector<64x64xbf16>, vector<78x64xf32> -> vector<78x64xf32>
    %c0_5 = arith.constant 0 : index
    %c0_6 = arith.constant 0 : index
    %5 = vector.load %arg7[%c0_5, %c0_6] : memref<78x64xf32, #tpu.memory_space<vmem>>, vector<78x64xf32>
    tpu.vector_store %arg7[%c0_5, %c0_6], %4 {strides = array<i32>} : memref<78x64xf32, #tpu.memory_space<vmem>>, vector<78x64xf32>,
    %c0_7 = arith.constant 0 : index
    %c1 = arith.constant 1 : index
    %c0_8 = arith.constant 0 : index
    %6 = vector.load %arg2[%c0_7, %c1, %c0_8] : memref<1x100x64xbf16, #tpu.memory_space<vmem>>, vector<1x78x64xbf16>
    %7 = vector.shape_cast %6 : vector<1x78x64xbf16> to vector<78x64xbf16>
    %c1_9 = arith.constant 1 : index
    %c0_10 = arith.constant 0 : index
    %c0_11 = arith.constant 0 : index
    %8 = vector.load %arg3[%c1_9, %c0_10, %c0_11] : memref<9x64x64xbf16, #tpu.memory_space<vmem>>, vector<1x64x64xbf16>
    %9 = vector.shape_cast %8 : vector<1x64x64xbf16> to vector<64x64xbf16>
    %cst_12 = arith.constant dense<0.000000e+00> : vector<78x64xf32>
    %10 = tpu.matmul %7, %9, %cst_12 {dimension_numbers = #tpu.dot_dimension_numbers<[1], [0], [0], [1], [0, 0, 1, 1], [], []>} : vector<78x64xbf16>, vector<64x64xbf16>, vector<78x64xf32> -> vector<78x64xf32>
    %c0_13 = arith.constant 0 : index
    %c0_14 = arith.constant 0 : index
    %11 = vector.load %arg7[%c0_13, %c0_14] : memref<78x64xf32, #tpu.memory_space<vmem>>, vector<78x64xf32>
    %12 = arith.addf %11, %10 : vector<78x64xf32>
    %c0_15 = arith.constant 0 : index
    %c0_16 = arith.constant 0 : index
    %13 = vector.load %arg7[%c0_15, %c0_16] : memref<78x64xf32, #tpu.memory_space<vmem>>, vector<78x64xf32>
    tpu.vector_store %arg7[%c0_15, %c0_16], %12 {strides = array<i32>} : memref<78x64xf32, #tpu.memory_space<vmem>>, vector<78x64xf32>,
    %c0_17 = arith.constant 0 : index
    %c2 = arith.constant 2 : index
    %c0_18 = arith.constant 0 : index
    %14 = vector.load %arg2[%c0_17, %c2, %c0_18] : memref<1x100x64xbf16, #tpu.memory_space<vmem>>, vector<1x78x64xbf16>
    %15 = vector.shape_cast %14 : vector<1x78x64xbf16> to vector<78x64xbf16>
    %c2_19 = arith.constant 2 : index
    %c0_20 = arith.constant 0 : index
    %c0_21 = arith.constant 0 : index
    %16 = vector.load %arg3[%c2_19, %c0_20, %c0_21] : memref<9x64x64xbf16, #tpu.memory_space<vmem>>, vector<1x64x64xbf16>
    %17 = vector.shape_cast %16 : vector<1x64x64xbf16> to vector<64x64xbf16>
    %cst_22 = arith.constant dense<0.000000e+00> : vector<78x64xf32>
    %18 = tpu.matmul %15, %17, %cst_22 {dimension_numbers = #tpu.dot_dimension_numbers<[1], [0], [0], [1], [0, 0, 1, 1], [], []>} : vector<78x64xbf16>, vector<64x64xbf16>, vector<78x64xf32> -> vector<78x64xf32>
    %c0_23 = arith.constant 0 : index
    %c0_24 = arith.constant 0 : index
    %19 = vector.load %arg7[%c0_23, %c0_24] : memref<78x64xf32, #tpu.memory_space<vmem>>, vector<78x64xf32>
    %20 = arith.addf %19, %18 : vector<78x64xf32>
    %c0_25 = arith.constant 0 : index
    %c0_26 = arith.constant 0 : index
    %21 = vector.load %arg7[%c0_25, %c0_26] : memref<78x64xf32, #tpu.memory_space<vmem>>, vector<78x64xf32>
    tpu.vector_store %arg7[%c0_25, %c0_26], %20 {strides = array<i32>} : memref<78x64xf32, #tpu.memory_space<vmem>>, vector<78x64xf32>,
    %c0_27 = arith.constant 0 : index
    %c10 = arith.constant 10 : index
    %c0_28 = arith.constant 0 : index
    %22 = vector.load %arg2[%c0_27, %c10, %c0_28] : memref<1x100x64xbf16, #tpu.memory_space<vmem>>, vector<1x78x64xbf16>
    %23 = vector.shape_cast %22 : vector<1x78x64xbf16> to vector<78x64xbf16>
    %c3 = arith.constant 3 : index
    %c0_29 = arith.constant 0 : index
    %c0_30 = arith.constant 0 : index
    %24 = vector.load %arg3[%c3, %c0_29, %c0_30] : memref<9x64x64xbf16, #tpu.memory_space<vmem>>, vector<1x64x64xbf16>
    %25 = vector.shape_cast %24 : vector<1x64x64xbf16> to vector<64x64xbf16>
    %cst_31 = arith.constant dense<0.000000e+00> : vector<78x64xf32>
    %26 = tpu.matmul %23, %25, %cst_31 {dimension_numbers = #tpu.dot_dimension_numbers<[1], [0], [0], [1], [0, 0, 1, 1], [], []>} : vector<78x64xbf16>, vector<64x64xbf16>, vector<78x64xf32> -> vector<78x64xf32>
    %c0_32 = arith.constant 0 : index
    %c0_33 = arith.constant 0 : index
    %27 = vector.load %arg7[%c0_32, %c0_33] : memref<78x64xf32, #tpu.memory_space<vmem>>, vector<78x64xf32>
    %28 = arith.addf %27, %26 : vector<78x64xf32>
    %c0_34 = arith.constant 0 : index
    %c0_35 = arith.constant 0 : index
    %29 = vector.load %arg7[%c0_34, %c0_35] : memref<78x64xf32, #tpu.memory_space<vmem>>, vector<78x64xf32>
    tpu.vector_store %arg7[%c0_34, %c0_35], %28 {strides = array<i32>} : memref<78x64xf32, #tpu.memory_space<vmem>>, vector<78x64xf32>,
    %c0_36 = arith.constant 0 : index
    %c11 = arith.constant 11 : index
    %c0_37 = arith.constant 0 : index
    %30 = vector.load %arg2[%c0_36, %c11, %c0_37] : memref<1x100x64xbf16, #tpu.memory_space<vmem>>, vector<1x78x64xbf16>
    %31 = vector.shape_cast %30 : vector<1x78x64xbf16> to vector<78x64xbf16>
    %c4 = arith.constant 4 : index
    %c0_38 = arith.constant 0 : index
    %c0_39 = arith.constant 0 : index
    %32 = vector.load %arg3[%c4, %c0_38, %c0_39] : memref<9x64x64xbf16, #tpu.memory_space<vmem>>, vector<1x64x64xbf16>
    %33 = vector.shape_cast %32 : vector<1x64x64xbf16> to vector<64x64xbf16>
    %cst_40 = arith.constant dense<0.000000e+00> : vector<78x64xf32>
    %34 = tpu.matmul %31, %33, %cst_40 {dimension_numbers = #tpu.dot_dimension_numbers<[1], [0], [0], [1], [0, 0, 1, 1], [], []>} : vector<78x64xbf16>, vector<64x64xbf16>, vector<78x64xf32> -> vector<78x64xf32>
    %c0_41 = arith.constant 0 : index
    %c0_42 = arith.constant 0 : index
    %35 = vector.load %arg7[%c0_41, %c0_42] : memref<78x64xf32, #tpu.memory_space<vmem>>, vector<78x64xf32>
    %36 = arith.addf %35, %34 : vector<78x64xf32>
    %c0_43 = arith.constant 0 : index
    %c0_44 = arith.constant 0 : index
    %37 = vector.load %arg7[%c0_43, %c0_44] : memref<78x64xf32, #tpu.memory_space<vmem>>, vector<78x64xf32>
    tpu.vector_store %arg7[%c0_43, %c0_44], %36 {strides = array<i32>} : memref<78x64xf32, #tpu.memory_space<vmem>>, vector<78x64xf32>,
    %c0_45 = arith.constant 0 : index
    %c12 = arith.constant 12 : index
    %c0_46 = arith.constant 0 : index
    %38 = vector.load %arg2[%c0_45, %c12, %c0_46] : memref<1x100x64xbf16, #tpu.memory_space<vmem>>, vector<1x78x64xbf16>
    %39 = vector.shape_cast %38 : vector<1x78x64xbf16> to vector<78x64xbf16>
    %c5 = arith.constant 5 : index
    %c0_47 = arith.constant 0 : index
    %c0_48 = arith.constant 0 : index
    %40 = vector.load %arg3[%c5, %c0_47, %c0_48] : memref<9x64x64xbf16, #tpu.memory_space<vmem>>, vector<1x64x64xbf16>
    %41 = vector.shape_cast %40 : vector<1x64x64xbf16> to vector<64x64xbf16>
    %cst_49 = arith.constant dense<0.000000e+00> : vector<78x64xf32>
    %42 = tpu.matmul %39, %41, %cst_49 {dimension_numbers = #tpu.dot_dimension_numbers<[1], [0], [0], [1], [0, 0, 1, 1], [], []>} : vector<78x64xbf16>, vector<64x64xbf16>, vector<78x64xf32> -> vector<78x64xf32>
    %c0_50 = arith.constant 0 : index
    %c0_51 = arith.constant 0 : index
    %43 = vector.load %arg7[%c0_50, %c0_51] : memref<78x64xf32, #tpu.memory_space<vmem>>, vector<78x64xf32>
    %44 = arith.addf %43, %42 : vector<78x64xf32>
    %c0_52 = arith.constant 0 : index
    %c0_53 = arith.constant 0 : index
    %45 = vector.load %arg7[%c0_52, %c0_53] : memref<78x64xf32, #tpu.memory_space<vmem>>, vector<78x64xf32>
    tpu.vector_store %arg7[%c0_52, %c0_53], %44 {strides = array<i32>} : memref<78x64xf32, #tpu.memory_space<vmem>>, vector<78x64xf32>,
    %c0_54 = arith.constant 0 : index
    %c20 = arith.constant 20 : index
    %c0_55 = arith.constant 0 : index
    %46 = vector.load %arg2[%c0_54, %c20, %c0_55] : memref<1x100x64xbf16, #tpu.memory_space<vmem>>, vector<1x78x64xbf16>
    %47 = vector.shape_cast %46 : vector<1x78x64xbf16> to vector<78x64xbf16>
    %c6 = arith.constant 6 : index
    %c0_56 = arith.constant 0 : index
    %c0_57 = arith.constant 0 : index
    %48 = vector.load %arg3[%c6, %c0_56, %c0_57] : memref<9x64x64xbf16, #tpu.memory_space<vmem>>, vector<1x64x64xbf16>
    %49 = vector.shape_cast %48 : vector<1x64x64xbf16> to vector<64x64xbf16>
    %cst_58 = arith.constant dense<0.000000e+00> : vector<78x64xf32>
    %50 = tpu.matmul %47, %49, %cst_58 {dimension_numbers = #tpu.dot_dimension_numbers<[1], [0], [0], [1], [0, 0, 1, 1], [], []>} : vector<78x64xbf16>, vector<64x64xbf16>, vector<78x64xf32> -> vector<78x64xf32>
    %c0_59 = arith.constant 0 : index
    %c0_60 = arith.constant 0 : index
    %51 = vector.load %arg7[%c0_59, %c0_60] : memref<78x64xf32, #tpu.memory_space<vmem>>, vector<78x64xf32>
    %52 = arith.addf %51, %50 : vector<78x64xf32>
    %c0_61 = arith.constant 0 : index
    %c0_62 = arith.constant 0 : index
    %53 = vector.load %arg7[%c0_61, %c0_62] : memref<78x64xf32, #tpu.memory_space<vmem>>, vector<78x64xf32>
    tpu.vector_store %arg7[%c0_61, %c0_62], %52 {strides = array<i32>} : memref<78x64xf32, #tpu.memory_space<vmem>>, vector<78x64xf32>,
    %c0_63 = arith.constant 0 : index
    %c21 = arith.constant 21 : index
    %c0_64 = arith.constant 0 : index
    %54 = vector.load %arg2[%c0_63, %c21, %c0_64] : memref<1x100x64xbf16, #tpu.memory_space<vmem>>, vector<1x78x64xbf16>
    %55 = vector.shape_cast %54 : vector<1x78x64xbf16> to vector<78x64xbf16>
    %c7 = arith.constant 7 : index
    %c0_65 = arith.constant 0 : index
    %c0_66 = arith.constant 0 : index
    %56 = vector.load %arg3[%c7, %c0_65, %c0_66] : memref<9x64x64xbf16, #tpu.memory_space<vmem>>, vector<1x64x64xbf16>
    %57 = vector.shape_cast %56 : vector<1x64x64xbf16> to vector<64x64xbf16>
    %cst_67 = arith.constant dense<0.000000e+00> : vector<78x64xf32>
    %58 = tpu.matmul %55, %57, %cst_67 {dimension_numbers = #tpu.dot_dimension_numbers<[1], [0], [0], [1], [0, 0, 1, 1], [], []>} : vector<78x64xbf16>, vector<64x64xbf16>, vector<78x64xf32> -> vector<78x64xf32>
    %c0_68 = arith.constant 0 : index
    %c0_69 = arith.constant 0 : index
    %59 = vector.load %arg7[%c0_68, %c0_69] : memref<78x64xf32, #tpu.memory_space<vmem>>, vector<78x64xf32>
    %60 = arith.addf %59, %58 : vector<78x64xf32>
    %c0_70 = arith.constant 0 : index
    %c0_71 = arith.constant 0 : index
    %61 = vector.load %arg7[%c0_70, %c0_71] : memref<78x64xf32, #tpu.memory_space<vmem>>, vector<78x64xf32>
    tpu.vector_store %arg7[%c0_70, %c0_71], %60 {strides = array<i32>} : memref<78x64xf32, #tpu.memory_space<vmem>>, vector<78x64xf32>,
    %c0_72 = arith.constant 0 : index
    %c22 = arith.constant 22 : index
    %c0_73 = arith.constant 0 : index
    %62 = vector.load %arg2[%c0_72, %c22, %c0_73] : memref<1x100x64xbf16, #tpu.memory_space<vmem>>, vector<1x78x64xbf16>
    %63 = vector.shape_cast %62 : vector<1x78x64xbf16> to vector<78x64xbf16>
    %c8 = arith.constant 8 : index
    %c0_74 = arith.constant 0 : index
    %c0_75 = arith.constant 0 : index
    %64 = vector.load %arg3[%c8, %c0_74, %c0_75] : memref<9x64x64xbf16, #tpu.memory_space<vmem>>, vector<1x64x64xbf16>
    %65 = vector.shape_cast %64 : vector<1x64x64xbf16> to vector<64x64xbf16>
    %cst_76 = arith.constant dense<0.000000e+00> : vector<78x64xf32>
    %66 = tpu.matmul %63, %65, %cst_76 {dimension_numbers = #tpu.dot_dimension_numbers<[1], [0], [0], [1], [0, 0, 1, 1], [], []>} : vector<78x64xbf16>, vector<64x64xbf16>, vector<78x64xf32> -> vector<78x64xf32>
    %c0_77 = arith.constant 0 : index
    %c0_78 = arith.constant 0 : index
    %67 = vector.load %arg7[%c0_77, %c0_78] : memref<78x64xf32, #tpu.memory_space<vmem>>, vector<78x64xf32>
    %68 = arith.addf %67, %66 : vector<78x64xf32>
    %c0_79 = arith.constant 0 : index
    %c0_80 = arith.constant 0 : index
    %69 = vector.load %arg7[%c0_79, %c0_80] : memref<78x64xf32, #tpu.memory_space<vmem>>, vector<78x64xf32>
    tpu.vector_store %arg7[%c0_79, %c0_80], %68 {strides = array<i32>} : memref<78x64xf32, #tpu.memory_space<vmem>>, vector<78x64xf32>,
    %c0_81 = arith.constant 0 : index
    %c0_82 = arith.constant 0 : index
    %70 = vector.load %arg7[%c0_81, %c0_82] : memref<78x64xf32, #tpu.memory_space<vmem>>, vector<78x64xf32>
    %c0_83 = arith.constant 0 : index
    %c0_84 = arith.constant 0 : index
    %71 = vector.load %arg4[%c0_83, %c0_84] : memref<1x64xf32, #tpu.memory_space<vmem>>, vector<1x64xf32>
    %72 = vector.broadcast %71 : vector<1x64xf32> to vector<78x64xf32>
    %73 = arith.addf %70, %72 : vector<78x64xf32>
    %c0_85 = arith.constant 0 : index
    %c0_86 = arith.constant 0 : index
    %c0_87 = arith.constant 0 : index
    %74 = vector.load %arg5[%c0_85, %c0_86, %c0_87] : memref<1x80x64xbf16, #tpu.memory_space<vmem>>, vector<1x78x64xbf16>
    %75 = vector.shape_cast %74 : vector<1x78x64xbf16> to vector<78x64xbf16>
    %76 = arith.extf %75 : vector<78x64xbf16> to vector<78x64xf32>
    %77 = arith.addf %73, %76 : vector<78x64xf32>
    %cst_88 = arith.constant 0.000000e+00 : f32
    %78 = vector.broadcast %cst_88 : f32 to vector<78x64xf32>
    %79 = arith.maximumf %77, %78 : vector<78x64xf32>
    %80 = arith.truncf %79 : vector<78x64xf32> to vector<78x64xbf16>
    %c0_89 = arith.constant 0 : index
    %c0_90 = arith.constant 0 : index
    %c0_91 = arith.constant 0 : index
    %81 = vector.load %arg6[%c0_89, %c0_90, %c0_91] : memref<1x80x64xbf16, #tpu.memory_space<vmem>>, vector<1x78x64xbf16>
    %82 = vector.shape_cast %81 : vector<1x78x64xbf16> to vector<78x64xbf16>
    %83 = vector.shape_cast %80 : vector<78x64xbf16> to vector<1x78x64xbf16>
    tpu.vector_store %arg6[%c0_89, %c0_90, %c0_91], %83 {strides = array<i32>} : memref<1x80x64xbf16, #tpu.memory_space<vmem>>, vector<1x78x64xbf16>,
    return
  }
  func.func @transform_0(%arg0: i32, %arg1: i32) -> (i32, i32, i32) {
    %c0_i32 = arith.constant 0 : i32
    %c0_i32_0 = arith.constant 0 : i32
    %c0_i32_1 = arith.constant 0 : i32
    return %arg1, %c0_i32, %c0_i32_0 : i32, i32, i32
  }
  func.func @transform_1(%arg0: i32, %arg1: i32) -> (i32, i32, i32) {
    %c0_i32 = arith.constant 0 : i32
    %c0_i32_0 = arith.constant 0 : i32
    %c0_i32_1 = arith.constant 0 : i32
    return %c0_i32, %c0_i32_0, %arg0 : i32, i32, i32
  }
  func.func @transform_2(%arg0: i32, %arg1: i32) -> (i32, i32) {
    %c0_i32 = arith.constant 0 : i32
    %c0_i32_0 = arith.constant 0 : i32
    return %c0_i32, %arg0 : i32, i32
  }
  func.func @transform_3(%arg0: i32, %arg1: i32) -> (i32, i32, i32) {
    %c0_i32 = arith.constant 0 : i32
    %c0_i32_0 = arith.constant 0 : i32
    return %arg1, %c0_i32, %arg0 : i32, i32, i32
  }
  func.func @transform_4(%arg0: i32, %arg1: i32) -> (i32, i32, i32) {
    %c0_i32 = arith.constant 0 : i32
    %c0_i32_0 = arith.constant 0 : i32
    return %arg1, %c0_i32, %arg0 : i32, i32, i32
  }
}

</mosaic_0001>

<llo_original>
// kernel: tpu_custom_call.1
$region0: #{tpu_custom_call.1}
  #allocation0 [shape = 'u32[]', space=smem, size = 0x4, offset = 0x4, fixed_abs, tag = 'smem constant byte address 0x4 - core index']
  #allocation1 [shape = 'u32[144,128]{1,0:T(1,128)}', space=vmem, size = 0x12000, scoped, tag = 'internal scratch']
  #allocation2 [shape = 'f32[78,64]{1,0:T(8,128)}', space=vmem, size = 0xa000, scoped, tag = 'scratch operand']
  %s0 = inlined_call_operand.vmem [shape: bf16[2,100,64], index: 0, kind: input, shape index: {}]
  %s1 = inlined_call_operand.vmem [shape: bf16[9,64,64], index: 1, kind: input, shape index: {}]
  %s2 = inlined_call_operand.vmem [shape: f32[1,64], index: 2, kind: input, shape index: {}]
  %s3 = inlined_call_operand.vmem [shape: bf16[2,80,64], index: 3, kind: input, shape index: {}]
  %s4 = inlined_call_operand.vmem [shape: bf16[2,80,64], index: 4, kind: output, shape index: {}]
  %s5 = sld [smem:[#allocation0]]
  $region49: #{tpu_custom_call.1} parent=0
    _
  %s7 = ssub.s32 1, %s5
  %s8 = scalar_select 0, %s7, %s5
  loop: start=0, step=1, limit=4
  $region2: #{tpu_custom_call.1} parent=0 // loop_pre_header
    _
  $region3: #{tpu_custom_call.1} parent=0 // loop_header
    %s10 = sphi 0, %s14
    %p11 = scmp.ge.s32.totalorder %s10, 4
    %s17 = sphi 0, %s29
    %s18 = sphi 0, %s25
    %s19 = sphi 0, %s17
    %s20 = sphi 0, %s18
    %s21 = sphi 0, %s19
    %s22 = sphi 0, %s20
    %s32 = sphi 0, %s34
    %s35 = sphi 0, %s32
    %s36 = sphi 0, %s35
    %s52 = sphi 0, %s36
    %s58 = sphi 0, %s60
    %s61 = sphi 0, %s58
    %s62 = sphi 0, %s61
    %s78 = sphi 0, %s62
    %s84 = sphi 0, %s86
    %s87 = sphi 0, %s84
    %s88 = sphi 0, %s87
    %s104 = sphi 0, %s88
    %s112 = sphi 0, %s114
    %s115 = sphi 0, %s112
    %s116 = sphi 0, %s115
    %s132 = sphi 0, %s116
    %s140 = sphi 0, %s142
    %s143 = sphi 0, %s140
    %s144 = sphi 0, %s143
    %s160 = sphi 0, %s144
  $region4: #{tpu_custom_call.1} parent=0 // loop_header_branch
    %13 = sbr.rel (%p11) target = $region8
  $region5: #{tpu_custom_call.1} parent=0 // loop_body
    %s15 = ssub.s32 %s10, 1
    %s16 = ssub.s32 %s10, 2
    %s23 = sadd.s32 1, %s18
    %p24 = scmp.ge.s32.totalorder %s23, 2
    %s25 = scalar_select %p24, 0, %s23
    %s26 = sadd.s32 1, %s17
    %s27 = scalar_select %p24, %s26, %s17
    %p28 = scmp.ge.s32.totalorder %s27, 1
    %s29 = scalar_select %p28, 0, %s27
    %s30 = ssub.s32 %s18, %s25
    %p31 = scmp.eq.s32.totalorder %s30, 0
    %s33 = sadd.s32 %s32, 1
    %s34 = scalar_select %p31, %s32, %s33
    %p37 = pneg %p31
    %p38 = scmp.eq.s32.totalorder %s10, 1
    %p39 = por %p37, %p38
    %p40 = scmp.ne.s32.totalorder %s32, %s35
    %p41 = scmp.eq.s32.totalorder %s10, 0
    %p42 = por %p40, %p41
    %p43 = scmp.ne.s32.totalorder %s32, %s35
    %p44 = scmp.eq.s32.totalorder %s15, 1
    %p45 = por %p43, %p44
    %p46 = scmp.ne.s32.totalorder %s35, %s36
    %p47 = scmp.eq.s32.totalorder %s15, 0
    %p48 = por %p46, %p47
    %p49 = scmp.ne.s32.totalorder %s35, %s36
    %p50 = scmp.eq.s32.totalorder %s16, 1
    %p51 = por %p49, %p50
    %p53 = scmp.ne.s32.totalorder %s36, %s52
    %p54 = scmp.eq.s32.totalorder %s16, 0
    %p55 = por %p53, %p54
    %s56 = ssub.s32 %s17, %s29
    %p57 = scmp.eq.s32.totalorder %s56, 0
    %s59 = sadd.s32 %s58, 1
    %s60 = scalar_select %p57, %s58, %s59
    %p63 = pneg %p57
    %p64 = scmp.eq.s32.totalorder %s10, 1
    %p65 = por %p63, %p64
    %p66 = scmp.ne.s32.totalorder %s58, %s61
    %p67 = scmp.eq.s32.totalorder %s10, 0
    %p68 = por %p66, %p67
    %p69 = scmp.ne.s32.totalorder %s58, %s61
    %p70 = scmp.eq.s32.totalorder %s15, 1
    %p71 = por %p69, %p70
    %p72 = scmp.ne.s32.totalorder %s61, %s62
    %p73 = scmp.eq.s32.totalorder %s15, 0
    %p74 = por %p72, %p73
    %p75 = scmp.ne.s32.totalorder %s61, %s62
    %p76 = scmp.eq.s32.totalorder %s16, 1
    %p77 = por %p75, %p76
    %p79 = scmp.ne.s32.totalorder %s62, %s78
    %p80 = scmp.eq.s32.totalorder %s16, 0
    %p81 = por %p79, %p80
    %s82 = ssub.s32 %s17, %s29
    %p83 = scmp.eq.s32.totalorder %s82, 0
    %s85 = sadd.s32 %s84, 1
    %s86 = scalar_select %p83, %s84, %s85
    %p89 = pneg %p83
    %p90 = scmp.eq.s32.totalorder %s10, 1
    %p91 = por %p89, %p90
    %p92 = scmp.ne.s32.totalorder %s84, %s87
    %p93 = scmp.eq.s32.totalorder %s10, 0
    %p94 = por %p92, %p93
    %p95 = scmp.ne.s32.totalorder %s84, %s87
    %p96 = scmp.eq.s32.totalorder %s15, 1
    %p97 = por %p95, %p96
    %p98 = scmp.ne.s32.totalorder %s87, %s88
    %p99 = scmp.eq.s32.totalorder %s15, 0
    %p100 = por %p98, %p99
    %p101 = scmp.ne.s32.totalorder %s87, %s88
    %p102 = scmp.eq.s32.totalorder %s16, 1
    %p103 = por %p101, %p102
    %p105 = scmp.ne.s32.totalorder %s88, %s104
    %p106 = scmp.eq.s32.totalorder %s16, 0
    %p107 = por %p105, %p106
    %s108 = ssub.s32 %s18, %s25
    %s109 = ssub.s32 %s17, %s29
    %s110 = sor.u32 %s108, %s109
    %p111 = scmp.eq.s32.totalorder %s110, 0
    %s113 = sadd.s32 %s112, 1
    %s114 = scalar_select %p111, %s112, %s113
    %p117 = pneg %p111
    %p118 = scmp.eq.s32.totalorder %s10, 1
    %p119 = por %p117, %p118
    %p120 = scmp.ne.s32.totalorder %s112, %s115
    %p121 = scmp.eq.s32.totalorder %s10, 0
    %p122 = por %p120, %p121
    %p123 = scmp.ne.s32.totalorder %s112, %s115
    %p124 = scmp.eq.s32.totalorder %s15, 1
    %p125 = por %p123, %p124
    %p126 = scmp.ne.s32.totalorder %s115, %s116
    %p127 = scmp.eq.s32.totalorder %s15, 0
    %p128 = por %p126, %p127
    %p129 = scmp.ne.s32.totalorder %s115, %s116
    %p130 = scmp.eq.s32.totalorder %s16, 1
    %p131 = por %p129, %p130
    %p133 = scmp.ne.s32.totalorder %s116, %s132
    %p134 = scmp.eq.s32.totalorder %s16, 0
    %p135 = por %p133, %p134
    %s136 = ssub.s32 %s18, %s25
    %s137 = ssub.s32 %s17, %s29
    %s138 = sor.u32 %s136, %s137
    %p139 = scmp.eq.s32.totalorder %s138, 0
    %s141 = sadd.s32 %s140, 1
    %s142 = scalar_select %p139, %s140, %s141
    %p145 = pneg %p139
    %p146 = scmp.eq.s32.totalorder %s10, 1
    %p147 = por %p145, %p146
    %p148 = scmp.ne.s32.totalorder %s140, %s143
    %p149 = scmp.eq.s32.totalorder %s10, 0
    %p150 = por %p148, %p149
    %p151 = scmp.ne.s32.totalorder %s140, %s143
    %p152 = scmp.eq.s32.totalorder %s15, 1
    %p153 = por %p151, %p152
    %p154 = scmp.ne.s32.totalorder %s143, %s144
    %p155 = scmp.eq.s32.totalorder %s15, 0
    %p156 = por %p154, %p155
    %p157 = scmp.ne.s32.totalorder %s143, %s144
    %p158 = scmp.eq.s32.totalorder %s16, 1
    %p159 = por %p157, %p158
    %p161 = scmp.ne.s32.totalorder %s144, %s160
    %p162 = scmp.eq.s32.totalorder %s16, 0
    %p163 = por %p161, %p162
    %p164 = scmp.le.s32.totalorder 1, %s10
    %p165 = scmp.lt.s32.totalorder %s10, 3
    %p166 = pnand %p164, %p165
    %p167 = pneg %p166
    // Predicated region
    $region9: #{tpu_custom_call.1} parent=5 // pred_check
      _
    $region10: #{tpu_custom_call.1} parent=5 // pred_check_branch
      %169 = sbr.rel (%p166) target = $region12
    $region11: #{tpu_custom_call.1} parent=5 // pred_region
      %s170 = ssub.s32 %s10, 1
      // Predicated region
      $region13: #{tpu_custom_call.1} parent=11 // pred_check
        %p171 = pneg %p74
      $region14: #{tpu_custom_call.1} parent=11 // pred_check_branch
        %173 = sbr.rel (%p171) target = $region16
      $region15: #{tpu_custom_call.1} parent=11 // pred_region
        %p174 = scmp.lt.s32.totalorder %s19, 0
        %s175 = scalar_select %p174, %s19, 0
        %s176 = smul.addr %s175, 4
        %s177 = scalar_lea.vmem %s1, %s176
      $region16: #{tpu_custom_call.1} parent=11 // pred_fallthru
        _
      // Predicated region
      $region17: #{tpu_custom_call.1} parent=11 // pred_check
        %p178 = pneg %p100
      $region18: #{tpu_custom_call.1} parent=11 // pred_check_branch
        %180 = sbr.rel (%p178) target = $region20
      $region19: #{tpu_custom_call.1} parent=11 // pred_region
        %p181 = scmp.lt.s32.totalorder %s19, 0
        %s182 = scalar_select %p181, %s19, 0
        %s183 = scalar_lea.vmem %s2, %s182
      $region20: #{tpu_custom_call.1} parent=11 // pred_fallthru
        _
    $region12: #{tpu_custom_call.1} parent=5 // pred_fallthru
      _
    %p184 = scmp.lt.s32.totalorder %s10, 2
    // Predicated region
    $region21: #{tpu_custom_call.1} parent=5 // pred_check
      %p185 = pneg %p184
    $region22: #{tpu_custom_call.1} parent=5 // pred_check_branch
      %187 = sbr.rel (%p185) target = $region24
    $region23: #{tpu_custom_call.1} parent=5 // pred_region
      // Predicated region
      $region25: #{tpu_custom_call.1} parent=23 // pred_check
        %p188 = pneg %p42
      $region26: #{tpu_custom_call.1} parent=23 // pred_check_branch
        %190 = sbr.rel (%p188) target = $region28
      $region27: #{tpu_custom_call.1} parent=23 // pred_region
        %p191 = scmp.lt.s32.totalorder %s18, 1
        %s192 = scalar_select %p191, %s18, 1
        %s193 = smul.addr %s192, 13
        %s194 = smul.addr %s193, 4
        %s195 = scalar_lea.vmem %s0, %s194
      $region28: #{tpu_custom_call.1} parent=23 // pred_fallthru
        _
      // Predicated region
      $region29: #{tpu_custom_call.1} parent=23 // pred_check
        %p196 = pneg %p122
      $region30: #{tpu_custom_call.1} parent=23 // pred_check_branch
        %198 = sbr.rel (%p196) target = $region32
      $region31: #{tpu_custom_call.1} parent=23 // pred_region
        %p199 = scmp.lt.s32.totalorder %s18, 1
        %s200 = scalar_select %p199, %s18, 1
        %p201 = scmp.lt.s32.totalorder %s17, 0
        %s202 = scalar_select %p201, %s17, 0
        %s203 = smul.addr %s200, 10
        %s204 = sadd.s32 %s202, %s203
        %s205 = smul.addr %s204, 4
        %s206 = scalar_lea.vmem %s3, %s205
      $region32: #{tpu_custom_call.1} parent=23 // pred_fallthru
        _
    $region24: #{tpu_custom_call.1} parent=5 // pred_fallthru
      _
    %p207 = scmp.le.s32.totalorder 1, %s10
    %p208 = scmp.lt.s32.totalorder %s10, 3
    %p209 = pnand %p207, %p208
    %p210 = pneg %p209
    // Predicated region
    $region33: #{tpu_custom_call.1} parent=5 // pred_check
      _
    $region34: #{tpu_custom_call.1} parent=5 // pred_check_branch
      %212 = sbr.rel (%p209) target = $region36
    $region35: #{tpu_custom_call.1} parent=5 // pred_region
      %s213 = ssub.s32 %s10, 1
      %p214 = scmp.lt.s32.totalorder %s20, 1
      %s215 = scalar_select %p214, %s20, 1
      %s216 = smul.addr %s215, 13
      %s217 = smul.addr %s216, 4
      %s218 = scalar_lea.vmem %s0, %s217
      %p219 = pneg %p48
      %p220 = pneg %p45
      %p221 = scmp.lt.s32.totalorder %s19, 0
      %s222 = scalar_select %p221, %s19, 0
      %s223 = smul.addr %s222, 4
      %s224 = scalar_lea.vmem %s1, %s223
      %p225 = pneg %p74
      %p226 = pneg %p71
      %p227 = scmp.lt.s32.totalorder %s19, 0
      %s228 = scalar_select %p227, %s19, 0
      %s229 = scalar_lea.vmem %s2, %s228
      %p230 = pneg %p100
      %p231 = pneg %p97
      %p232 = scmp.lt.s32.totalorder %s20, 1
      %s233 = scalar_select %p232, %s20, 1
      %p234 = scmp.lt.s32.totalorder %s19, 0
      %s235 = scalar_select %p234, %s19, 0
      %s236 = smul.addr %s233, 10
      %s237 = sadd.s32 %s235, %s236
      %s238 = smul.addr %s237, 4
      %s239 = scalar_lea.vmem %s3, %s238
      %p240 = pneg %p128
      %p241 = pneg %p125
      %p242 = pneg %p156
      %p243 = pneg %p153
      %p244 = scmp.lt.s32.totalorder %s20, 1
      %s245 = scalar_select %p244, %s20, 1
      %p246 = scmp.lt.s32.totalorder %s19, 0
      %s247 = scalar_select %p246, %s19, 0
      %s248 = smul.addr %s245, 10
      %s249 = sadd.s32 %s247, %s248
      %s250 = smul.addr %s249, 4
      %s251 = scalar_lea.vmem %s4, %s250
      %p252 = scmp.lt.s32.totalorder %s20, 1
      %s253 = scalar_select %p252, %s20, 1
      %s254 = smul.addr %s253, 13
      %s255 = smul.addr %s254, 4
      %s256 = scalar_lea.vmem %s0, %s255
      %p257 = scmp.lt.s32.totalorder %s19, 0
      %s258 = scalar_select %p257, %s19, 0
      %s259 = smul.addr %s258, 4
      %s260 = scalar_lea.vmem %s1, %s259
      %p261 = scmp.lt.s32.totalorder %s19, 0
      %s262 = scalar_select %p261, %s19, 0
      %s263 = scalar_lea.vmem %s2, %s262
      %p264 = scmp.lt.s32.totalorder %s20, 1
      %s265 = scalar_select %p264, %s20, 1
      %p266 = scmp.lt.s32.totalorder %s19, 0
      %s267 = scalar_select %p266, %s19, 0
      %s268 = smul.addr %s265, 10
      %s269 = sadd.s32 %s267, %s268
      %s270 = smul.addr %s269, 4
      %s271 = scalar_lea.vmem %s3, %s270
      %p272 = scmp.lt.s32.totalorder %s20, 1
      %s273 = scalar_select %p272, %s20, 1
      %p274 = scmp.lt.s32.totalorder %s19, 0
      %s275 = scalar_select %p274, %s19, 0
      %s276 = smul.addr %s273, 10
      %s277 = sadd.s32 %s275, %s276
      %s278 = smul.addr %s277, 4
      %s279 = scalar_lea.vmem %s4, %s278
      %v281 = vld [vmem:[%s256] sm:$0xf]
      %v282 = vld [vmem:[%s256 + $0x4] sm:$0xf]
      %v283 = vld [vmem:[%s256 + $0x8] sm:$0xf]
      %v284 = vld [vmem:[%s256 + $0xc] sm:$0xf]
      %v285 = vld [vmem:[%s256 + $0x10] sm:$0xf]
      %v286 = vld [vmem:[%s256 + $0x14] sm:$0xf]
      %v287 = vld [vmem:[%s256 + $0x18] sm:$0xf]
      %v288 = vld [vmem:[%s256 + $0x1c] sm:$0xf]
      %v289 = vld [vmem:[%s256 + $0x20] sm:$0xf]
      %v290 = vld [vmem:[%s256 + $0x24] sm:$0x7]
      %v291 = vld [vmem:[%s260] sm:$0xf]
      %v292 = vld [vmem:[%s260 + $0x4] sm:$0xf]
      %v293 = vld [vmem:[%s260 + $0x8] sm:$0xf]
      %v294 = vld [vmem:[%s260 + $0xc] sm:$0xf]
      %v295 = vld [vmem:[%s260 + $0x10] sm:$0xf]
      %v296 = vld [vmem:[%s260 + $0x14] sm:$0xf]
      %v297 = vld [vmem:[%s260 + $0x18] sm:$0xf]
      %v298 = vld [vmem:[%s260 + $0x1c] sm:$0xf]
      %v309 = vunpack.c.l.b16 %v281
      %v310 = vunpack.c.l.b16 %v282
      %v311 = vunpack.c.l.b16 %v283
      %v312 = vunpack.c.l.b16 %v284
      %v313 = vunpack.c.l.b16 %v285
      %v314 = vunpack.c.l.b16 %v286
      %v315 = vunpack.c.l.b16 %v287
      %v316 = vunpack.c.l.b16 %v288
      %v317 = vunpack.c.l.b16 %v289
      %v318 = vunpack.c.l.b16 %v290
      %v319 = vpack.c.b16 %v310, %v309
      %v320 = vpack.c.b16 %v312, %v311
      %v321 = vpack.c.b16 %v314, %v313
      %v322 = vpack.c.b16 %v316, %v315
      %v323 = vpack.c.b16 %v318, %v317
      %v332 = vunpack.c.l.b16 %v291
      %v333 = vunpack.c.l.b16 %v292
      %v334 = vunpack.c.l.b16 %v293
      %v335 = vunpack.c.l.b16 %v294
      %v336 = vunpack.c.l.b16 %v295
      %v337 = vunpack.c.l.b16 %v296
      %v338 = vunpack.c.l.b16 %v297
      %v339 = vunpack.c.l.b16 %v298
      %v340 = vpack.c.b16 %v333, %v332
      %v341 = vpack.c.b16 %v335, %v334
      %v342 = vpack.c.b16 %v337, %v336
      %v343 = vpack.c.b16 %v339, %v338
      %vm348 = vcmask 523264
      %v350 = vsel %vm348, %v319, 0
      %v353 = vsel %vm348, %v320, 0
      %v356 = vsel %vm348, %v321, 0
      %v359 = vsel %vm348, %v322, 0
      %v362 = vsel %vm348, %v323, 0
      %364 = vmatprep.subr.bf16.mxu0 0
      %365 = vmatpush1.bf16.msra.mxu0 %v340
      %366 = vmatprep.subr.bf16.mxu0 0
      %367 = vmatpush1.bf16.msra.mxu0 %v341
      %368 = vmatprep.subr.bf16.mxu0 0
      %369 = vmatpush1.bf16.msra.mxu0 %v342
      %370 = vmatprep.subr.bf16.mxu0 0
      %371 = vmatpush1.bf16.msra.mxu0 %v343
      %372 = vmatprep.subr.bf16.mxu0 0
      %373 = vmatpush1.bf16.msra.mxu0 0
      %374 = vmatprep.subr.bf16.mxu0 0
      %375 = vmatpush1.bf16.msra.mxu0 0
      %376 = vmatprep.subr.bf16.mxu0 0
      %377 = vmatpush1.bf16.msra.mxu0 0
      %378 = vmatprep.subr.bf16.mxu0 0
      %379 = vmatpush1.bf16.msra.mxu0 0
      %380 = vmatprep.subr.bf16.mxu0 0
      %381 = vmatpush1.bf16.msra.mxu0 0
      %382 = vmatprep.subr.bf16.mxu0 0
      %383 = vmatpush1.bf16.msra.mxu0 0
      %384 = vmatprep.subr.bf16.mxu0 0
      %385 = vmatpush1.bf16.msra.mxu0 0
      %386 = vmatprep.subr.bf16.mxu0 0
      %387 = vmatpush1.bf16.msra.mxu0 0
      %388 = vmatprep.subr.bf16.mxu0 0
      %389 = vmatpush1.bf16.msra.mxu0 0
      %390 = vmatprep.subr.bf16.mxu0 0
      %391 = vmatpush1.bf16.msra.mxu0 0
      %392 = vmatprep.subr.bf16.mxu0 0
      %393 = vmatpush1.bf16.msra.mxu0 0
      %394 = vmatprep.subr.bf16.mxu0 0
      %395 = vmatpush1.bf16.msra.mxu0 0
      %396 = vmatprep.mubr.bf16.mxu0 0
      %397 = vmatmul.mubr.bf16.gmra.mrb[0].mxu0 %v350
      %v398 = vpop.f32.mrb[0].mxu0
      %v399 = vadd.f32 0.0, %v398
      %v400 = vpop.f32.mrb[0].mxu0
      %v401 = vpop.f32.mrb[0].mxu0
      %v402 = vadd.f32 0.0, %v401
      %v403 = vpop.f32.mrb[0].mxu0
      %404 = vmatprep.mubr.bf16.mxu0 0
      %405 = vmatmul.mubr.bf16.gmra.mrb[0].mxu0 %v353
      %v406 = vpop.f32.mrb[0].mxu0
      %v407 = vadd.f32 0.0, %v406
      %v408 = vpop.f32.mrb[0].mxu0
      %v409 = vpop.f32.mrb[0].mxu0
      %v410 = vadd.f32 0.0, %v409
      %v411 = vpop.f32.mrb[0].mxu0
      %412 = vmatprep.mubr.bf16.mxu0 0
      %413 = vmatmul.mubr.bf16.gmra.mrb[0].mxu0 %v356
      %v414 = vpop.f32.mrb[0].mxu0
      %v415 = vadd.f32 0.0, %v414
      %v416 = vpop.f32.mrb[0].mxu0
      %v417 = vpop.f32.mrb[0].mxu0
      %v418 = vadd.f32 0.0, %v417
      %v419 = vpop.f32.mrb[0].mxu0
      %420 = vmatprep.mubr.bf16.mxu0 0
      %421 = vmatmul.mubr.bf16.gmra.mrb[0].mxu0 %v359
      %v422 = vpop.f32.mrb[0].mxu0
      %v423 = vadd.f32 0.0, %v422
      %v424 = vpop.f32.mrb[0].mxu0
      %v425 = vpop.f32.mrb[0].mxu0
      %v426 = vadd.f32 0.0, %v425
      %v427 = vpop.f32.mrb[0].mxu0
      %428 = vmatprep.mubr.bf16.mxu0 0
      %429 = vmatmul.mubr.bf16.gmra.mrb[0].mxu0 %v362
      %v430 = vpop.f32.mrb[0].mxu0
      %v431 = vadd.f32 0.0, %v430
      %v432 = vpop.f32.mrb[0].mxu0
      %v433 = vpop.f32.mrb[0].mxu0
      %v434 = vadd.f32 0.0, %v433
      %v435 = vpop.f32.mrb[0].mxu0
      %436 = vdwg.mxu0
      %437 = vst.msk [vmem:[#allocation2] sm:$0xff] %vm348, %v399
      %438 = vst.msk [vmem:[#allocation2 + $0x8] sm:$0xff] %vm348, %v402
      %439 = vst.msk [vmem:[#allocation2 + $0x10] sm:$0xff] %vm348, %v407
      %440 = vst.msk [vmem:[#allocation2 + $0x18] sm:$0xff] %vm348, %v410
      %441 = vst.msk [vmem:[#allocation2 + $0x20] sm:$0xff] %vm348, %v415
      %442 = vst.msk [vmem:[#allocation2 + $0x28] sm:$0xff] %vm348, %v418
      %443 = vst.msk [vmem:[#allocation2 + $0x30] sm:$0xff] %vm348, %v423
      %444 = vst.msk [vmem:[#allocation2 + $0x38] sm:$0xff] %vm348, %v426
      %445 = vst.msk [vmem:[#allocation2 + $0x40] sm:$0xff] %vm348, %v431
      %vm446 = vcmask 521216
      %447 = vst.msk [vmem:[#allocation2 + $0x48] sm:$0x3f] %vm446, %v434
      %v448 = vld [vmem:[%s256] sm:$0xf]
      %v449 = vld [vmem:[%s256 + $0x4] sm:$0xf]
      %v450 = vld [vmem:[%s256 + $0x8] sm:$0xf]
      %v451 = vld [vmem:[%s256 + $0xc] sm:$0xf]
      %v452 = vld [vmem:[%s256 + $0x10] sm:$0xf]
      %v453 = vld [vmem:[%s256 + $0x14] sm:$0xf]
      %v454 = vld [vmem:[%s256 + $0x18] sm:$0xf]
      %v455 = vld [vmem:[%s256 + $0x1c] sm:$0xf]
      %v456 = vld [vmem:[%s256 + $0x20] sm:$0xf]
      %v457 = vld [vmem:[%s256 + $0x24] sm:$0xf]
      %s458 = scalar_lea.vmem %s260, 32
      %v459 = vld [vmem:[%s458] sm:$0xf]
      %v460 = vld [vmem:[%s458 + $0x4] sm:$0xf]
      %v461 = vld [vmem:[%s458 + $0x8] sm:$0xf]
      %v462 = vld [vmem:[%s458 + $0xc] sm:$0xf]
      %v463 = vld [vmem:[%s458 + $0x10] sm:$0xf]
      %v464 = vld [vmem:[%s458 + $0x14] sm:$0xf]
      %v465 = vld [vmem:[%s458 + $0x18] sm:$0xf]
      %v466 = vld [vmem:[%s458 + $0x1c] sm:$0xf]
      %v477 = vunpack.c.l.b16 %v448
      %v478 = vunpack.c.l.b16 %v449
      %v479 = vunpack.c.l.b16 %v450
      %v480 = vunpack.c.l.b16 %v451
      %v481 = vunpack.c.l.b16 %v452
      %v482 = vunpack.c.l.b16 %v453
      %v483 = vunpack.c.l.b16 %v454
      %v484 = vunpack.c.l.b16 %v455
      %v485 = vunpack.c.l.b16 %v456
      %v486 = vunpack.c.l.b16 %v457
      %v487 = vpack.c.b16 %v478, %v477
      %v488 = vpack.c.b16 %v480, %v479
      %v489 = vpack.c.b16 %v482, %v481
      %v490 = vpack.c.b16 %v484, %v483
      %v491 = vpack.c.b16 %v486, %v485
      %vm492 = vsmask.f32 7424
      %v494 = vshrl.u32 %v487, 16
      %v496 = vshll.u32 %v487, 16
      %v498 = vrot.slane %v496, 1
      %v499 = vor.u32 %v494, %v498
      %v501 = vshll.u32 %v488, 16
      %v503 = vrot.slane %v501, 1
      %v504 = vsel %vm492, %v499, %v503
      %v505 = vshrl.u32 %v488, 16
      %v507 = vor.u32 %v505, %v503
      %v509 = vshll.u32 %v489, 16
      %v511 = vrot.slane %v509, 1
      %v512 = vsel %vm492, %v507, %v511
      %v513 = vshrl.u32 %v489, 16
      %v515 = vor.u32 %v513, %v511
      %v517 = vshll.u32 %v490, 16
      %v519 = vrot.slane %v517, 1
      %v520 = vsel %vm492, %v515, %v519
      %v521 = vshrl.u32 %v490, 16
      %v523 = vor.u32 %v521, %v519
      %v525 = vshll.u32 %v491, 16
      %v527 = vrot.slane %v525, 1
      %v528 = vsel %vm492, %v523, %v527
      %v529 = vshrl.u32 %v491, 16
      %v531 = vor.u32 %v529, %v527
      %v540 = vunpack.c.l.b16 %v459
      %v541 = vunpack.c.l.b16 %v460
      %v542 = vunpack.c.l.b16 %v461
      %v543 = vunpack.c.l.b16 %v462
      %v544 = vunpack.c.l.b16 %v463
      %v545 = vunpack.c.l.b16 %v464
      %v546 = vunpack.c.l.b16 %v465
      %v547 = vunpack.c.l.b16 %v466
      %v548 = vpack.c.b16 %v541, %v540
      %v549 = vpack.c.b16 %v543, %v542
      %v550 = vpack.c.b16 %v545, %v544
      %v551 = vpack.c.b16 %v547, %v546
      %v557 = vsel %vm348, %v504, 0
      %v560 = vsel %vm348, %v512, 0
      %v563 = vsel %vm348, %v520, 0
      %v566 = vsel %vm348, %v528, 0
      %v569 = vsel %vm348, %v531, 0
      %571 = vmatprep.subr.bf16.mxu0 0
      %572 = vmatpush1.bf16.msra.mxu0 %v548
      %573 = vmatprep.subr.bf16.mxu0 0
      %574 = vmatpush1.bf16.msra.mxu0 %v549
      %575 = vmatprep.subr.bf16.mxu0 0
      %576 = vmatpush1.bf16.msra.mxu0 %v550
      %577 = vmatprep.subr.bf16.mxu0 0
      %578 = vmatpush1.bf16.msra.mxu0 %v551
      %579 = vmatprep.subr.bf16.mxu0 0
      %580 = vmatpush1.bf16.msra.mxu0 0
      %581 = vmatprep.subr.bf16.mxu0 0
      %582 = vmatpush1.bf16.msra.mxu0 0
      %583 = vmatprep.subr.bf16.mxu0 0
      %584 = vmatpush1.bf16.msra.mxu0 0
      %585 = vmatprep.subr.bf16.mxu0 0
      %586 = vmatpush1.bf16.msra.mxu0 0
      %587 = vmatprep.subr.bf16.mxu0 0
      %588 = vmatpush1.bf16.msra.mxu0 0
      %589 = vmatprep.subr.bf16.mxu0 0
      %590 = vmatpush1.bf16.msra.mxu0 0
      %591 = vmatprep.subr.bf16.mxu0 0
      %592 = vmatpush1.bf16.msra.mxu0 0
      %593 = vmatprep.subr.bf16.mxu0 0
      %594 = vmatpush1.bf16.msra.mxu0 0
      %595 = vmatprep.subr.bf16.mxu0 0
      %596 = vmatpush1.bf16.msra.mxu0 0
      %597 = vmatprep.subr.bf16.mxu0 0
      %598 = vmatpush1.bf16.msra.mxu0 0
      %599 = vmatprep.subr.bf16.mxu0 0
      %600 = vmatpush1.bf16.msra.mxu0 0
      %601 = vmatprep.subr.bf16.mxu0 0
      %602 = vmatpush1.bf16.msra.mxu0 0
      %603 = vmatprep.mubr.bf16.mxu0 0
      %604 = vmatmul.mubr.bf16.gmra.mrb[0].mxu0 %v557
      %v605 = vpop.f32.mrb[0].mxu0
      %v606 = vadd.f32 0.0, %v605
      %v607 = vpop.f32.mrb[0].mxu0
      %v608 = vpop.f32.mrb[0].mxu0
      %v609 = vadd.f32 0.0, %v608
      %v610 = vpop.f32.mrb[0].mxu0
      %611 = vmatprep.mubr.bf16.mxu0 0
      %612 = vmatmul.mubr.bf16.gmra.mrb[0].mxu0 %v560
      %v613 = vpop.f32.mrb[0].mxu0
      %v614 = vadd.f32 0.0, %v613
      %v615 = vpop.f32.mrb[0].mxu0
      %v616 = vpop.f32.mrb[0].mxu0
      %v617 = vadd.f32 0.0, %v616
      %v618 = vpop.f32.mrb[0].mxu0
      %619 = vmatprep.mubr.bf16.mxu0 0
      %620 = vmatmul.mubr.bf16.gmra.mrb[0].mxu0 %v563
      %v621 = vpop.f32.mrb[0].mxu0
      %v622 = vadd.f32 0.0, %v621
      %v623 = vpop.f32.mrb[0].mxu0
      %v624 = vpop.f32.mrb[0].mxu0
      %v625 = vadd.f32 0.0, %v624
      %v626 = vpop.f32.mrb[0].mxu0
      %627 = vmatprep.mubr.bf16.mxu0 0
      %628 = vmatmul.mubr.bf16.gmra.mrb[0].mxu0 %v566
      %v629 = vpop.f32.mrb[0].mxu0
      %v630 = vadd.f32 0.0, %v629
      %v631 = vpop.f32.mrb[0].mxu0
      %v632 = vpop.f32.mrb[0].mxu0
      %v633 = vadd.f32 0.0, %v632
      %v634 = vpop.f32.mrb[0].mxu0
      %635 = vmatprep.mubr.bf16.mxu0 0
      %636 = vmatmul.mubr.bf16.gmra.mrb[0].mxu0 %v569
      %v637 = vpop.f32.mrb[0].mxu0
      %v638 = vadd.f32 0.0, %v637
      %v639 = vpop.f32.mrb[0].mxu0
      %v640 = vpop.f32.mrb[0].mxu0
      %v641 = vadd.f32 0.0, %v640
      %v642 = vpop.f32.mrb[0].mxu0
      %643 = vdwg.mxu0
      %v644 = vld [vmem:[#allocation2] sm:$0xff]
      %v645 = vld [vmem:[#allocation2 + $0x8] sm:$0xff]
      %v646 = vld [vmem:[#allocation2 + $0x10] sm:$0xff]
      %v647 = vld [vmem:[#allocation2 + $0x18] sm:$0xff]
      %v648 = vld [vmem:[#allocation2 + $0x20] sm:$0xff]
      %v649 = vld [vmem:[#allocation2 + $0x28] sm:$0xff]
      %v650 = vld [vmem:[#allocation2 + $0x30] sm:$0xff]
      %v651 = vld [vmem:[#allocation2 + $0x38] sm:$0xff]
      %v652 = vld [vmem:[#allocation2 + $0x40] sm:$0xff]
      %v653 = vld [vmem:[#allocation2 + $0x48] sm:$0x3f]
      %v654 = vadd.f32 %v644, %v606
      %v655 = vadd.f32 %v645, %v609
      %v656 = vadd.f32 %v646, %v614
      %v657 = vadd.f32 %v647, %v617
      %v658 = vadd.f32 %v648, %v622
      %v659 = vadd.f32 %v649, %v625
      %v660 = vadd.f32 %v650, %v630
      %v661 = vadd.f32 %v651, %v633
      %v662 = vadd.f32 %v652, %v638
      %v663 = vadd.f32 %v653, %v641
      %664 = vst.msk [vmem:[#allocation2] sm:$0xff] %vm348, %v654
      %665 = vst.msk [vmem:[#allocation2 + $0x8] sm:$0xff] %vm348, %v655
      %666 = vst.msk [vmem:[#allocation2 + $0x10] sm:$0xff] %vm348, %v656
      %667 = vst.msk [vmem:[#allocation2 + $0x18] sm:$0xff] %vm348, %v657
      %668 = vst.msk [vmem:[#allocation2 + $0x20] sm:$0xff] %vm348, %v658
      %669 = vst.msk [vmem:[#allocation2 + $0x28] sm:$0xff] %vm348, %v659
      %670 = vst.msk [vmem:[#allocation2 + $0x30] sm:$0xff] %vm348, %v660
      %671 = vst.msk [vmem:[#allocation2 + $0x38] sm:$0xff] %vm348, %v661
      %672 = vst.msk [vmem:[#allocation2 + $0x40] sm:$0xff] %vm348, %v662
      %673 = vst.msk [vmem:[#allocation2 + $0x48] sm:$0x3f] %vm446, %v663
      %v674 = vld [vmem:[%s256] sm:$0xe]
      %v675 = vld [vmem:[%s256 + $0x4] sm:$0xf]
      %v676 = vld [vmem:[%s256 + $0x8] sm:$0xf]
      %v677 = vld [vmem:[%s256 + $0xc] sm:$0xf]
      %v678 = vld [vmem:[%s256 + $0x10] sm:$0xf]
      %v679 = vld [vmem:[%s256 + $0x14] sm:$0xf]
      %v680 = vld [vmem:[%s256 + $0x18] sm:$0xf]
      %v681 = vld [vmem:[%s256 + $0x1c] sm:$0xf]
      %v682 = vld [vmem:[%s256 + $0x20] sm:$0xf]
      %v683 = vld [vmem:[%s256 + $0x24] sm:$0xf]
      %s684 = scalar_lea.vmem %s260, 64
      %v685 = vld [vmem:[%s684] sm:$0xf]
      %v686 = vld [vmem:[%s684 + $0x4] sm:$0xf]
      %v687 = vld [vmem:[%s684 + $0x8] sm:$0xf]
      %v688 = vld [vmem:[%s684 + $0xc] sm:$0xf]
      %v689 = vld [vmem:[%s684 + $0x10] sm:$0xf]
      %v690 = vld [vmem:[%s684 + $0x14] sm:$0xf]
      %v691 = vld [vmem:[%s684 + $0x18] sm:$0xf]
      %v692 = vld [vmem:[%s684 + $0x1c] sm:$0xf]
      %v703 = vunpack.c.l.b16 %v674
      %v704 = vunpack.c.l.b16 %v675
      %v705 = vunpack.c.l.b16 %v676
      %v706 = vunpack.c.l.b16 %v677
      %v707 = vunpack.c.l.b16 %v678
      %v708 = vunpack.c.l.b16 %v679
      %v709 = vunpack.c.l.b16 %v680
      %v710 = vunpack.c.l.b16 %v681
      %v711 = vunpack.c.l.b16 %v682
      %v712 = vunpack.c.l.b16 %v683
      %v713 = vpack.c.b16 %v704, %v703
      %v714 = vpack.c.b16 %v706, %v705
      %v715 = vpack.c.b16 %v708, %v707
      %v716 = vpack.c.b16 %v710, %v709
      %v717 = vpack.c.b16 %v712, %v711
      %vm718 = vcmask 1046528
      %v719 = vrot.slane %v713, 1
      %v720 = vrot.slane %v714, 1
      %v721 = vsel %vm718, %v719, %v720
      %v722 = vrot.slane %v715, 1
      %v723 = vsel %vm718, %v720, %v722
      %v724 = vrot.slane %v716, 1
      %v725 = vsel %vm718, %v722, %v724
      %v726 = vrot.slane %v717, 1
      %v727 = vsel %vm718, %v724, %v726
      %v736 = vunpack.c.l.b16 %v685
      %v737 = vunpack.c.l.b16 %v686
      %v738 = vunpack.c.l.b16 %v687
      %v739 = vunpack.c.l.b16 %v688
      %v740 = vunpack.c.l.b16 %v689
      %v741 = vunpack.c.l.b16 %v690
      %v742 = vunpack.c.l.b16 %v691
      %v743 = vunpack.c.l.b16 %v692
      %v744 = vpack.c.b16 %v737, %v736
      %v745 = vpack.c.b16 %v739, %v738
      %v746 = vpack.c.b16 %v741, %v740
      %v747 = vpack.c.b16 %v743, %v742
      %v753 = vsel %vm348, %v721, 0
      %v756 = vsel %vm348, %v723, 0
      %v759 = vsel %vm348, %v725, 0
      %v762 = vsel %vm348, %v727, 0
      %v765 = vsel %vm348, %v726, 0
      %767 = vmatprep.subr.bf16.mxu0 0
      %768 = vmatpush1.bf16.msra.mxu0 %v744
      %769 = vmatprep.subr.bf16.mxu0 0
      %770 = vmatpush1.bf16.msra.mxu0 %v745
      %771 = vmatprep.subr.bf16.mxu0 0
      %772 = vmatpush1.bf16.msra.mxu0 %v746
      %773 = vmatprep.subr.bf16.mxu0 0
      %774 = vmatpush1.bf16.msra.mxu0 %v747
      %775 = vmatprep.subr.bf16.mxu0 0
      %776 = vmatpush1.bf16.msra.mxu0 0
      %777 = vmatprep.subr.bf16.mxu0 0
      %778 = vmatpush1.bf16.msra.mxu0 0
      %779 = vmatprep.subr.bf16.mxu0 0
      %780 = vmatpush1.bf16.msra.mxu0 0
      %781 = vmatprep.subr.bf16.mxu0 0
      %782 = vmatpush1.bf16.msra.mxu0 0
      %783 = vmatprep.subr.bf16.mxu0 0
      %784 = vmatpush1.bf16.msra.mxu0 0
      %785 = vmatprep.subr.bf16.mxu0 0
      %786 = vmatpush1.bf16.msra.mxu0 0
      %787 = vmatprep.subr.bf16.mxu0 0
      %788 = vmatpush1.bf16.msra.mxu0 0
      %789 = vmatprep.subr.bf16.mxu0 0
      %790 = vmatpush1.bf16.msra.mxu0 0
      %791 = vmatprep.subr.bf16.mxu0 0
      %792 = vmatpush1.bf16.msra.mxu0 0
      %793 = vmatprep.subr.bf16.mxu0 0
      %794 = vmatpush1.bf16.msra.mxu0 0
      %795 = vmatprep.subr.bf16.mxu0 0
      %796 = vmatpush1.bf16.msra.mxu0 0
      %797 = vmatprep.subr.bf16.mxu0 0
      %798 = vmatpush1.bf16.msra.mxu0 0
      %799 = vmatprep.mubr.bf16.mxu0 0
      %800 = vmatmul.mubr.bf16.gmra.mrb[0].mxu0 %v753
      %v801 = vpop.f32.mrb[0].mxu0
      %v802 = vadd.f32 0.0, %v801
      %v803 = vpop.f32.mrb[0].mxu0
      %v804 = vpop.f32.mrb[0].mxu0
      %v805 = vadd.f32 0.0, %v804
      %v806 = vpop.f32.mrb[0].mxu0
      %807 = vmatprep.mubr.bf16.mxu0 0
      %808 = vmatmul.mubr.bf16.gmra.mrb[0].mxu0 %v756
      %v809 = vpop.f32.mrb[0].mxu0
      %v810 = vadd.f32 0.0, %v809
      %v811 = vpop.f32.mrb[0].mxu0
      %v812 = vpop.f32.mrb[0].mxu0
      %v813 = vadd.f32 0.0, %v812
      %v814 = vpop.f32.mrb[0].mxu0
      %815 = vmatprep.mubr.bf16.mxu0 0
      %816 = vmatmul.mubr.bf16.gmra.mrb[0].mxu0 %v759
      %v817 = vpop.f32.mrb[0].mxu0
      %v818 = vadd.f32 0.0, %v817
      %v819 = vpop.f32.mrb[0].mxu0
      %v820 = vpop.f32.mrb[0].mxu0
      %v821 = vadd.f32 0.0, %v820
      %v822 = vpop.f32.mrb[0].mxu0
      %823 = vmatprep.mubr.bf16.mxu0 0
      %824 = vmatmul.mubr.bf16.gmra.mrb[0].mxu0 %v762
      %v825 = vpop.f32.mrb[0].mxu0
      %v826 = vadd.f32 0.0, %v825
      %v827 = vpop.f32.mrb[0].mxu0
      %v828 = vpop.f32.mrb[0].mxu0
      %v829 = vadd.f32 0.0, %v828
      %v830 = vpop.f32.mrb[0].mxu0
      %831 = vmatprep.mubr.bf16.mxu0 0
      %832 = vmatmul.mubr.bf16.gmra.mrb[0].mxu0 %v765
      %v833 = vpop.f32.mrb[0].mxu0
      %v834 = vadd.f32 0.0, %v833
      %v835 = vpop.f32.mrb[0].mxu0
      %v836 = vpop.f32.mrb[0].mxu0
      %v837 = vadd.f32 0.0, %v836
      %v838 = vpop.f32.mrb[0].mxu0
      %839 = vdwg.mxu0
      %v840 = vld [vmem:[#allocation2] sm:$0xff]
      %v841 = vld [vmem:[#allocation2 + $0x8] sm:$0xff]
      %v842 = vld [vmem:[#allocation2 + $0x10] sm:$0xff]
      %v843 = vld [vmem:[#allocation2 + $0x18] sm:$0xff]
      %v844 = vld [vmem:[#allocation2 + $0x20] sm:$0xff]
      %v845 = vld [vmem:[#allocation2 + $0x28] sm:$0xff]
      %v846 = vld [vmem:[#allocation2 + $0x30] sm:$0xff]
      %v847 = vld [vmem:[#allocation2 + $0x38] sm:$0xff]
      %v848 = vld [vmem:[#allocation2 + $0x40] sm:$0xff]
      %v849 = vld [vmem:[#allocation2 + $0x48] sm:$0x3f]
      %v850 = vadd.f32 %v840, %v802
      %v851 = vadd.f32 %v841, %v805
      %v852 = vadd.f32 %v842, %v810
      %v853 = vadd.f32 %v843, %v813
      %v854 = vadd.f32 %v844, %v818
      %v855 = vadd.f32 %v845, %v821
      %v856 = vadd.f32 %v846, %v826
      %v857 = vadd.f32 %v847, %v829
      %v858 = vadd.f32 %v848, %v834
      %v859 = vadd.f32 %v849, %v837
      %860 = vst.msk [vmem:[#allocation2] sm:$0xff] %vm348, %v850
      %861 = vst.msk [vmem:[#allocation2 + $0x8] sm:$0xff] %vm348, %v851
      %862 = vst.msk [vmem:[#allocation2 + $0x10] sm:$0xff] %vm348, %v852
      %863 = vst.msk [vmem:[#allocation2 + $0x18] sm:$0xff] %vm348, %v853
      %864 = vst.msk [vmem:[#allocation2 + $0x20] sm:$0xff] %vm348, %v854
      %865 = vst.msk [vmem:[#allocation2 + $0x28] sm:$0xff] %vm348, %v855
      %866 = vst.msk [vmem:[#allocation2 + $0x30] sm:$0xff] %vm348, %v856
      %867 = vst.msk [vmem:[#allocation2 + $0x38] sm:$0xff] %vm348, %v857
      %868 = vst.msk [vmem:[#allocation2 + $0x40] sm:$0xff] %vm348, %v858
      %869 = vst.msk [vmem:[#allocation2 + $0x48] sm:$0x3f] %vm446, %v859
      %v870 = vld [vmem:[%s256 + $0x4] sm:$0xe]
      %v871 = vld [vmem:[%s256 + $0x8] sm:$0xf]
      %v872 = vld [vmem:[%s256 + $0xc] sm:$0xf]
      %v873 = vld [vmem:[%s256 + $0x10] sm:$0xf]
      %v874 = vld [vmem:[%s256 + $0x14] sm:$0xf]
      %v875 = vld [vmem:[%s256 + $0x18] sm:$0xf]
      %v876 = vld [vmem:[%s256 + $0x1c] sm:$0xf]
      %v877 = vld [vmem:[%s256 + $0x20] sm:$0xf]
      %v878 = vld [vmem:[%s256 + $0x24] sm:$0xf]
      %v879 = vld [vmem:[%s256 + $0x28] sm:$0xf]
      %s880 = scalar_lea.vmem %s260, 96
      %v881 = vld [vmem:[%s880] sm:$0xf]
      %v882 = vld [vmem:[%s880 + $0x4] sm:$0xf]
      %v883 = vld [vmem:[%s880 + $0x8] sm:$0xf]
      %v884 = vld [vmem:[%s880 + $0xc] sm:$0xf]
      %v885 = vld [vmem:[%s880 + $0x10] sm:$0xf]
      %v886 = vld [vmem:[%s880 + $0x14] sm:$0xf]
      %v887 = vld [vmem:[%s880 + $0x18] sm:$0xf]
      %v888 = vld [vmem:[%s880 + $0x1c] sm:$0xf]
      %v899 = vunpack.c.l.b16 %v870
      %v900 = vunpack.c.l.b16 %v871
      %v901 = vunpack.c.l.b16 %v872
      %v902 = vunpack.c.l.b16 %v873
      %v903 = vunpack.c.l.b16 %v874
      %v904 = vunpack.c.l.b16 %v875
      %v905 = vunpack.c.l.b16 %v876
      %v906 = vunpack.c.l.b16 %v877
      %v907 = vunpack.c.l.b16 %v878
      %v908 = vunpack.c.l.b16 %v879
      %v909 = vpack.c.b16 %v900, %v899
      %v910 = vpack.c.b16 %v902, %v901
      %v911 = vpack.c.b16 %v904, %v903
      %v912 = vpack.c.b16 %v906, %v905
      %v913 = vpack.c.b16 %v908, %v907
      %v914 = vrot.slane %v909, 1
      %v915 = vrot.slane %v910, 1
      %v916 = vsel %vm718, %v914, %v915
      %v917 = vrot.slane %v911, 1
      %v918 = vsel %vm718, %v915, %v917
      %v919 = vrot.slane %v912, 1
      %v920 = vsel %vm718, %v917, %v919
      %v921 = vrot.slane %v913, 1
      %v922 = vsel %vm718, %v919, %v921
      %v931 = vunpack.c.l.b16 %v881
      %v932 = vunpack.c.l.b16 %v882
      %v933 = vunpack.c.l.b16 %v883
      %v934 = vunpack.c.l.b16 %v884
      %v935 = vunpack.c.l.b16 %v885
      %v936 = vunpack.c.l.b16 %v886
      %v937 = vunpack.c.l.b16 %v887
      %v938 = vunpack.c.l.b16 %v888
      %v939 = vpack.c.b16 %v932, %v931
      %v940 = vpack.c.b16 %v934, %v933
      %v941 = vpack.c.b16 %v936, %v935
      %v942 = vpack.c.b16 %v938, %v937
      %v948 = vsel %vm348, %v916, 0
      %v951 = vsel %vm348, %v918, 0
      %v954 = vsel %vm348, %v920, 0
      %v957 = vsel %vm348, %v922, 0
      %v960 = vsel %vm348, %v921, 0
      %962 = vmatprep.subr.bf16.mxu0 0
      %963 = vmatpush1.bf16.msra.mxu0 %v939
      %964 = vmatprep.subr.bf16.mxu0 0
      %965 = vmatpush1.bf16.msra.mxu0 %v940
      %966 = vmatprep.subr.bf16.mxu0 0
      %967 = vmatpush1.bf16.msra.mxu0 %v941
      %968 = vmatprep.subr.bf16.mxu0 0
      %969 = vmatpush1.bf16.msra.mxu0 %v942
      %970 = vmatprep.subr.bf16.mxu0 0
      %971 = vmatpush1.bf16.msra.mxu0 0
      %972 = vmatprep.subr.bf16.mxu0 0
      %973 = vmatpush1.bf16.msra.mxu0 0
      %974 = vmatprep.subr.bf16.mxu0 0
      %975 = vmatpush1.bf16.msra.mxu0 0
      %976 = vmatprep.subr.bf16.mxu0 0
      %977 = vmatpush1.bf16.msra.mxu0 0
      %978 = vmatprep.subr.bf16.mxu0 0
      %979 = vmatpush1.bf16.msra.mxu0 0
      %980 = vmatprep.subr.bf16.mxu0 0
      %981 = vmatpush1.bf16.msra.mxu0 0
      %982 = vmatprep.subr.bf16.mxu0 0
      %983 = vmatpush1.bf16.msra.mxu0 0
      %984 = vmatprep.subr.bf16.mxu0 0
      %985 = vmatpush1.bf16.msra.mxu0 0
      %986 = vmatprep.subr.bf16.mxu0 0
      %987 = vmatpush1.bf16.msra.mxu0 0
      %988 = vmatprep.subr.bf16.mxu0 0
      %989 = vmatpush1.bf16.msra.mxu0 0
      %990 = vmatprep.subr.bf16.mxu0 0
      %991 = vmatpush1.bf16.msra.mxu0 0
      %992 = vmatprep.subr.bf16.mxu0 0
      %993 = vmatpush1.bf16.msra.mxu0 0
      %994 = vmatprep.mubr.bf16.mxu0 0
      %995 = vmatmul.mubr.bf16.gmra.mrb[0].mxu0 %v948
      %v996 = vpop.f32.mrb[0].mxu0
      %v997 = vadd.f32 0.0, %v996
      %v998 = vpop.f32.mrb[0].mxu0
      %v999 = vpop.f32.mrb[0].mxu0
      %v1000 = vadd.f32 0.0, %v999
      %v1001 = vpop.f32.mrb[0].mxu0
      %1002 = vmatprep.mubr.bf16.mxu0 0
      %1003 = vmatmul.mubr.bf16.gmra.mrb[0].mxu0 %v951
      %v1004 = vpop.f32.mrb[0].mxu0
      %v1005 = vadd.f32 0.0, %v1004
      %v1006 = vpop.f32.mrb[0].mxu0
      %v1007 = vpop.f32.mrb[0].mxu0
      %v1008 = vadd.f32 0.0, %v1007
      %v1009 = vpop.f32.mrb[0].mxu0
      %1010 = vmatprep.mubr.bf16.mxu0 0
      %1011 = vmatmul.mubr.bf16.gmra.mrb[0].mxu0 %v954
      %v1012 = vpop.f32.mrb[0].mxu0
      %v1013 = vadd.f32 0.0, %v1012
      %v1014 = vpop.f32.mrb[0].mxu0
      %v1015 = vpop.f32.mrb[0].mxu0
      %v1016 = vadd.f32 0.0, %v1015
      %v1017 = vpop.f32.mrb[0].mxu0
      %1018 = vmatprep.mubr.bf16.mxu0 0
      %1019 = vmatmul.mubr.bf16.gmra.mrb[0].mxu0 %v957
      %v1020 = vpop.f32.mrb[0].mxu0
      %v1021 = vadd.f32 0.0, %v1020
      %v1022 = vpop.f32.mrb[0].mxu0
      %v1023 = vpop.f32.mrb[0].mxu0
      %v1024 = vadd.f32 0.0, %v1023
      %v1025 = vpop.f32.mrb[0].mxu0
      %1026 = vmatprep.mubr.bf16.mxu0 0
      %1027 = vmatmul.mubr.bf16.gmra.mrb[0].mxu0 %v960
      %v1028 = vpop.f32.mrb[0].mxu0
      %v1029 = vadd.f32 0.0, %v1028
      %v1030 = vpop.f32.mrb[0].mxu0
      %v1031 = vpop.f32.mrb[0].mxu0
      %v1032 = vadd.f32 0.0, %v1031
      %v1033 = vpop.f32.mrb[0].mxu0
      %1034 = vdwg.mxu0
      %v1035 = vld [vmem:[#allocation2] sm:$0xff]
      %v1036 = vld [vmem:[#allocation2 + $0x8] sm:$0xff]
      %v1037 = vld [vmem:[#allocation2 + $0x10] sm:$0xff]
      %v1038 = vld [vmem:[#allocation2 + $0x18] sm:$0xff]
      %v1039 = vld [vmem:[#allocation2 + $0x20] sm:$0xff]
      %v1040 = vld [vmem:[#allocation2 + $0x28] sm:$0xff]
      %v1041 = vld [vmem:[#allocation2 + $0x30] sm:$0xff]
      %v1042 = vld [vmem:[#allocation2 + $0x38] sm:$0xff]
      %v1043 = vld [vmem:[#allocation2 + $0x40] sm:$0xff]
      %v1044 = vld [vmem:[#allocation2 + $0x48] sm:$0x3f]
      %v1045 = vadd.f32 %v1035, %v997
      %v1046 = vadd.f32 %v1036, %v1000
      %v1047 = vadd.f32 %v1037, %v1005
      %v1048 = vadd.f32 %v1038, %v1008
      %v1049 = vadd.f32 %v1039, %v1013
      %v1050 = vadd.f32 %v1040, %v1016
      %v1051 = vadd.f32 %v1041, %v1021
      %v1052 = vadd.f32 %v1042, %v1024
      %v1053 = vadd.f32 %v1043, %v1029
      %v1054 = vadd.f32 %v1044, %v1032
      %1055 = vst.msk [vmem:[#allocation2] sm:$0xff] %vm348, %v1045
      %1056 = vst.msk [vmem:[#allocation2 + $0x8] sm:$0xff] %vm348, %v1046
      %1057 = vst.msk [vmem:[#allocation2 + $0x10] sm:$0xff] %vm348, %v1047
      %1058 = vst.msk [vmem:[#allocation2 + $0x18] sm:$0xff] %vm348, %v1048
      %1059 = vst.msk [vmem:[#allocation2 + $0x20] sm:$0xff] %vm348, %v1049
      %1060 = vst.msk [vmem:[#allocation2 + $0x28] sm:$0xff] %vm348, %v1050
      %1061 = vst.msk [vmem:[#allocation2 + $0x30] sm:$0xff] %vm348, %v1051
      %1062 = vst.msk [vmem:[#allocation2 + $0x38] sm:$0xff] %vm348, %v1052
      %1063 = vst.msk [vmem:[#allocation2 + $0x40] sm:$0xff] %vm348, %v1053
      %1064 = vst.msk [vmem:[#allocation2 + $0x48] sm:$0x3f] %vm446, %v1054
      %v1065 = vld [vmem:[%s256 + $0x4] sm:$0xe]
      %v1066 = vld [vmem:[%s256 + $0x8] sm:$0xf]
      %v1067 = vld [vmem:[%s256 + $0xc] sm:$0xf]
      %v1068 = vld [vmem:[%s256 + $0x10] sm:$0xf]
      %v1069 = vld [vmem:[%s256 + $0x14] sm:$0xf]
      %v1070 = vld [vmem:[%s256 + $0x18] sm:$0xf]
      %v1071 = vld [vmem:[%s256 + $0x1c] sm:$0xf]
      %v1072 = vld [vmem:[%s256 + $0x20] sm:$0xf]
      %v1073 = vld [vmem:[%s256 + $0x24] sm:$0xf]
      %v1074 = vld [vmem:[%s256 + $0x28] sm:$0xf]
      %v1075 = vld [vmem:[%s256 + $0x2c] sm:$0x1]
      %s1076 = scalar_lea.vmem %s260, 128
      %v1077 = vld [vmem:[%s1076] sm:$0xf]
      %v1078 = vld [vmem:[%s1076 + $0x4] sm:$0xf]
      %v1079 = vld [vmem:[%s1076 + $0x8] sm:$0xf]
      %v1080 = vld [vmem:[%s1076 + $0xc] sm:$0xf]
      %v1081 = vld [vmem:[%s1076 + $0x10] sm:$0xf]
      %v1082 = vld [vmem:[%s1076 + $0x14] sm:$0xf]
      %v1083 = vld [vmem:[%s1076 + $0x18] sm:$0xf]
      %v1084 = vld [vmem:[%s1076 + $0x1c] sm:$0xf]
      %v1096 = vunpack.c.l.b16 %v1065
      %v1097 = vunpack.c.l.b16 %v1066
      %v1098 = vunpack.c.l.b16 %v1067
      %v1099 = vunpack.c.l.b16 %v1068
      %v1100 = vunpack.c.l.b16 %v1069
      %v1101 = vunpack.c.l.b16 %v1070
      %v1102 = vunpack.c.l.b16 %v1071
      %v1103 = vunpack.c.l.b16 %v1072
      %v1104 = vunpack.c.l.b16 %v1073
      %v1105 = vunpack.c.l.b16 %v1074
      %v1106 = vunpack.c.l.b16 %v1075
      %v1107 = vpack.c.b16 %v1097, %v1096
      %v1108 = vpack.c.b16 %v1099, %v1098
      %v1109 = vpack.c.b16 %v1101, %v1100
      %v1110 = vpack.c.b16 %v1103, %v1102
      %v1111 = vpack.c.b16 %v1105, %v1104
      %v1112 = vpack.c.b16 %v1106, %v1106
      %vm1113 = vsmask.f32 6400
      %v1115 = vshrl.u32 %v1107, 16
      %v1117 = vrot.slane %v1115, 1
      %v1118 = vshll.u32 %v1107, 16
      %v1120 = vrot.slane %v1118, 2
      %v1121 = vor.u32 %v1117, %v1120
      %v1123 = vshrl.u32 %v1108, 16
      %v1125 = vrot.slane %v1123, 1
      %v1126 = vshll.u32 %v1108, 16
      %v1128 = vrot.slane %v1126, 2
      %v1129 = vor.u32 %v1125, %v1128
      %v1130 = vsel %vm1113, %v1121, %v1129
      %v1132 = vshrl.u32 %v1109, 16
      %v1134 = vrot.slane %v1132, 1
      %v1135 = vshll.u32 %v1109, 16
      %v1137 = vrot.slane %v1135, 2
      %v1138 = vor.u32 %v1134, %v1137
      %v1139 = vsel %vm1113, %v1129, %v1138
      %v1141 = vshrl.u32 %v1110, 16
      %v1143 = vrot.slane %v1141, 1
      %v1144 = vshll.u32 %v1110, 16
      %v1146 = vrot.slane %v1144, 2
      %v1147 = vor.u32 %v1143, %v1146
      %v1148 = vsel %vm1113, %v1138, %v1147
      %v1150 = vshrl.u32 %v1111, 16
      %v1152 = vrot.slane %v1150, 1
      %v1153 = vshll.u32 %v1111, 16
      %v1155 = vrot.slane %v1153, 2
      %v1156 = vor.u32 %v1152, %v1155
      %v1157 = vsel %vm1113, %v1147, %v1156
      %v1159 = vshll.u32 %v1112, 16
      %v1161 = vrot.slane %v1159, 2
      %v1162 = vsel %vm1113, %v1156, %v1161
      %v1171 = vunpack.c.l.b16 %v1077
      %v1172 = vunpack.c.l.b16 %v1078
      %v1173 = vunpack.c.l.b16 %v1079
      %v1174 = vunpack.c.l.b16 %v1080
      %v1175 = vunpack.c.l.b16 %v1081
      %v1176 = vunpack.c.l.b16 %v1082
      %v1177 = vunpack.c.l.b16 %v1083
      %v1178 = vunpack.c.l.b16 %v1084
      %v1179 = vpack.c.b16 %v1172, %v1171
      %v1180 = vpack.c.b16 %v1174, %v1173
      %v1181 = vpack.c.b16 %v1176, %v1175
      %v1182 = vpack.c.b16 %v1178, %v1177
      %v1188 = vsel %vm348, %v1130, 0
      %v1191 = vsel %vm348, %v1139, 0
      %v1194 = vsel %vm348, %v1148, 0
      %v1197 = vsel %vm348, %v1157, 0
      %v1200 = vsel %vm348, %v1162, 0
      %1202 = vmatprep.subr.bf16.mxu0 0
      %1203 = vmatpush1.bf16.msra.mxu0 %v1179
      %1204 = vmatprep.subr.bf16.mxu0 0
      %1205 = vmatpush1.bf16.msra.mxu0 %v1180
      %1206 = vmatprep.subr.bf16.mxu0 0
      %1207 = vmatpush1.bf16.msra.mxu0 %v1181
      %1208 = vmatprep.subr.bf16.mxu0 0
      %1209 = vmatpush1.bf16.msra.mxu0 %v1182
      %1210 = vmatprep.subr.bf16.mxu0 0
      %1211 = vmatpush1.bf16.msra.mxu0 0
      %1212 = vmatprep.subr.bf16.mxu0 0
      %1213 = vmatpush1.bf16.msra.mxu0 0
      %1214 = vmatprep.subr.bf16.mxu0 0
      %1215 = vmatpush1.bf16.msra.mxu0 0
      %1216 = vmatprep.subr.bf16.mxu0 0
      %1217 = vmatpush1.bf16.msra.mxu0 0
      %1218 = vmatprep.subr.bf16.mxu0 0
      %1219 = vmatpush1.bf16.msra.mxu0 0
      %1220 = vmatprep.subr.bf16.mxu0 0
      %1221 = vmatpush1.bf16.msra.mxu0 0
      %1222 = vmatprep.subr.bf16.mxu0 0
      %1223 = vmatpush1.bf16.msra.mxu0 0
      %1224 = vmatprep.subr.bf16.mxu0 0
      %1225 = vmatpush1.bf16.msra.mxu0 0
      %1226 = vmatprep.subr.bf16.mxu0 0
      %1227 = vmatpush1.bf16.msra.mxu0 0
      %1228 = vmatprep.subr.bf16.mxu0 0
      %1229 = vmatpush1.bf16.msra.mxu0 0
      %1230 = vmatprep.subr.bf16.mxu0 0
      %1231 = vmatpush1.bf16.msra.mxu0 0
      %1232 = vmatprep.subr.bf16.mxu0 0
      %1233 = vmatpush1.bf16.msra.mxu0 0
      %1234 = vmatprep.mubr.bf16.mxu0 0
      %1235 = vmatmul.mubr.bf16.gmra.mrb[0].mxu0 %v1188
      %v1236 = vpop.f32.mrb[0].mxu0
      %v1237 = vadd.f32 0.0, %v1236
      %v1238 = vpop.f32.mrb[0].mxu0
      %v1239 = vpop.f32.mrb[0].mxu0
      %v1240 = vadd.f32 0.0, %v1239
      %v1241 = vpop.f32.mrb[0].mxu0
      %1242 = vmatprep.mubr.bf16.mxu0 0
      %1243 = vmatmul.mubr.bf16.gmra.mrb[0].mxu0 %v1191
      %v1244 = vpop.f32.mrb[0].mxu0
      %v1245 = vadd.f32 0.0, %v1244
      %v1246 = vpop.f32.mrb[0].mxu0
      %v1247 = vpop.f32.mrb[0].mxu0
      %v1248 = vadd.f32 0.0, %v1247
      %v1249 = vpop.f32.mrb[0].mxu0
      %1250 = vmatprep.mubr.bf16.mxu0 0
      %1251 = vmatmul.mubr.bf16.gmra.mrb[0].mxu0 %v1194
      %v1252 = vpop.f32.mrb[0].mxu0
      %v1253 = vadd.f32 0.0, %v1252
      %v1254 = vpop.f32.mrb[0].mxu0
      %v1255 = vpop.f32.mrb[0].mxu0
      %v1256 = vadd.f32 0.0, %v1255
      %v1257 = vpop.f32.mrb[0].mxu0
      %1258 = vmatprep.mubr.bf16.mxu0 0
      %1259 = vmatmul.mubr.bf16.gmra.mrb[0].mxu0 %v1197
      %v1260 = vpop.f32.mrb[0].mxu0
      %v1261 = vadd.f32 0.0, %v1260
      %v1262 = vpop.f32.mrb[0].mxu0
      %v1263 = vpop.f32.mrb[0].mxu0
      %v1264 = vadd.f32 0.0, %v1263
      %v1265 = vpop.f32.mrb[0].mxu0
      %1266 = vmatprep.mubr.bf16.mxu0 0
      %1267 = vmatmul.mubr.bf16.gmra.mrb[0].mxu0 %v1200
      %v1268 = vpop.f32.mrb[0].mxu0
      %v1269 = vadd.f32 0.0, %v1268
      %v1270 = vpop.f32.mrb[0].mxu0
      %v1271 = vpop.f32.mrb[0].mxu0
      %v1272 = vadd.f32 0.0, %v1271
      %v1273 = vpop.f32.mrb[0].mxu0
      %1274 = vdwg.mxu0
      %v1275 = vld [vmem:[#allocation2] sm:$0xff]
      %v1276 = vld [vmem:[#allocation2 + $0x8] sm:$0xff]
      %v1277 = vld [vmem:[#allocation2 + $0x10] sm:$0xff]
      %v1278 = vld [vmem:[#allocation2 + $0x18] sm:$0xff]
      %v1279 = vld [vmem:[#allocation2 + $0x20] sm:$0xff]
      %v1280 = vld [vmem:[#allocation2 + $0x28] sm:$0xff]
      %v1281 = vld [vmem:[#allocation2 + $0x30] sm:$0xff]
      %v1282 = vld [vmem:[#allocation2 + $0x38] sm:$0xff]
      %v1283 = vld [vmem:[#allocation2 + $0x40] sm:$0xff]
      %v1284 = vld [vmem:[#allocation2 + $0x48] sm:$0x3f]
      %v1285 = vadd.f32 %v1275, %v1237
      %v1286 = vadd.f32 %v1276, %v1240
      %v1287 = vadd.f32 %v1277, %v1245
      %v1288 = vadd.f32 %v1278, %v1248
      %v1289 = vadd.f32 %v1279, %v1253
      %v1290 = vadd.f32 %v1280, %v1256
      %v1291 = vadd.f32 %v1281, %v1261
      %v1292 = vadd.f32 %v1282, %v1264
      %v1293 = vadd.f32 %v1283, %v1269
      %v1294 = vadd.f32 %v1284, %v1272
      %1295 = vst.msk [vmem:[#allocation2] sm:$0xff] %vm348, %v1285
      %1296 = vst.msk [vmem:[#allocation2 + $0x8] sm:$0xff] %vm348, %v1286
      %1297 = vst.msk [vmem:[#allocation2 + $0x10] sm:$0xff] %vm348, %v1287
      %1298 = vst.msk [vmem:[#allocation2 + $0x18] sm:$0xff] %vm348, %v1288
      %1299 = vst.msk [vmem:[#allocation2 + $0x20] sm:$0xff] %vm348, %v1289
      %1300 = vst.msk [vmem:[#allocation2 + $0x28] sm:$0xff] %vm348, %v1290
      %1301 = vst.msk [vmem:[#allocation2 + $0x30] sm:$0xff] %vm348, %v1291
      %1302 = vst.msk [vmem:[#allocation2 + $0x38] sm:$0xff] %vm348, %v1292
      %1303 = vst.msk [vmem:[#allocation2 + $0x40] sm:$0xff] %vm348, %v1293
      %1304 = vst.msk [vmem:[#allocation2 + $0x48] sm:$0x3f] %vm446, %v1294
      %v1305 = vld [vmem:[%s256 + $0x4] sm:$0xc]
      %v1306 = vld [vmem:[%s256 + $0x8] sm:$0xf]
      %v1307 = vld [vmem:[%s256 + $0xc] sm:$0xf]
      %v1308 = vld [vmem:[%s256 + $0x10] sm:$0xf]
      %v1309 = vld [vmem:[%s256 + $0x14] sm:$0xf]
      %v1310 = vld [vmem:[%s256 + $0x18] sm:$0xf]
      %v1311 = vld [vmem:[%s256 + $0x1c] sm:$0xf]
      %v1312 = vld [vmem:[%s256 + $0x20] sm:$0xf]
      %v1313 = vld [vmem:[%s256 + $0x24] sm:$0xf]
      %v1314 = vld [vmem:[%s256 + $0x28] sm:$0xf]
      %v1315 = vld [vmem:[%s256 + $0x2c] sm:$0x1]
      %s1316 = scalar_lea.vmem %s260, 160
      %v1317 = vld [vmem:[%s1316] sm:$0xf]
      %v1318 = vld [vmem:[%s1316 + $0x4] sm:$0xf]
      %v1319 = vld [vmem:[%s1316 + $0x8] sm:$0xf]
      %v1320 = vld [vmem:[%s1316 + $0xc] sm:$0xf]
      %v1321 = vld [vmem:[%s1316 + $0x10] sm:$0xf]
      %v1322 = vld [vmem:[%s1316 + $0x14] sm:$0xf]
      %v1323 = vld [vmem:[%s1316 + $0x18] sm:$0xf]
      %v1324 = vld [vmem:[%s1316 + $0x1c] sm:$0xf]
      %v1336 = vunpack.c.l.b16 %v1305
      %v1337 = vunpack.c.l.b16 %v1306
      %v1338 = vunpack.c.l.b16 %v1307
      %v1339 = vunpack.c.l.b16 %v1308
      %v1340 = vunpack.c.l.b16 %v1309
      %v1341 = vunpack.c.l.b16 %v1310
      %v1342 = vunpack.c.l.b16 %v1311
      %v1343 = vunpack.c.l.b16 %v1312
      %v1344 = vunpack.c.l.b16 %v1313
      %v1345 = vunpack.c.l.b16 %v1314
      %v1346 = vunpack.c.l.b16 %v1315
      %v1347 = vpack.c.b16 %v1337, %v1336
      %v1348 = vpack.c.b16 %v1339, %v1338
      %v1349 = vpack.c.b16 %v1341, %v1340
      %v1350 = vpack.c.b16 %v1343, %v1342
      %v1351 = vpack.c.b16 %v1345, %v1344
      %v1352 = vpack.c.b16 %v1346, %v1346
      %vm1353 = vcmask 1045504
      %v1354 = vrot.slane %v1347, 2
      %v1355 = vrot.slane %v1348, 2
      %v1356 = vsel %vm1353, %v1354, %v1355
      %v1357 = vrot.slane %v1349, 2
      %v1358 = vsel %vm1353, %v1355, %v1357
      %v1359 = vrot.slane %v1350, 2
      %v1360 = vsel %vm1353, %v1357, %v1359
      %v1361 = vrot.slane %v1351, 2
      %v1362 = vsel %vm1353, %v1359, %v1361
      %v1363 = vrot.slane %v1352, 2
      %v1364 = vsel %vm1353, %v1361, %v1363
      %v1373 = vunpack.c.l.b16 %v1317
      %v1374 = vunpack.c.l.b16 %v1318
      %v1375 = vunpack.c.l.b16 %v1319
      %v1376 = vunpack.c.l.b16 %v1320
      %v1377 = vunpack.c.l.b16 %v1321
      %v1378 = vunpack.c.l.b16 %v1322
      %v1379 = vunpack.c.l.b16 %v1323
      %v1380 = vunpack.c.l.b16 %v1324
      %v1381 = vpack.c.b16 %v1374, %v1373
      %v1382 = vpack.c.b16 %v1376, %v1375
      %v1383 = vpack.c.b16 %v1378, %v1377
      %v1384 = vpack.c.b16 %v1380, %v1379
      %v1390 = vsel %vm348, %v1356, 0
      %v1393 = vsel %vm348, %v1358, 0
      %v1396 = vsel %vm348, %v1360, 0
      %v1399 = vsel %vm348, %v1362, 0
      %v1402 = vsel %vm348, %v1364, 0
      %1404 = vmatprep.subr.bf16.mxu0 0
      %1405 = vmatpush1.bf16.msra.mxu0 %v1381
      %1406 = vmatprep.subr.bf16.mxu0 0
      %1407 = vmatpush1.bf16.msra.mxu0 %v1382
      %1408 = vmatprep.subr.bf16.mxu0 0
      %1409 = vmatpush1.bf16.msra.mxu0 %v1383
      %1410 = vmatprep.subr.bf16.mxu0 0
      %1411 = vmatpush1.bf16.msra.mxu0 %v1384
      %1412 = vmatprep.subr.bf16.mxu0 0
      %1413 = vmatpush1.bf16.msra.mxu0 0
      %1414 = vmatprep.subr.bf16.mxu0 0
      %1415 = vmatpush1.bf16.msra.mxu0 0
      %1416 = vmatprep.subr.bf16.mxu0 0
      %1417 = vmatpush1.bf16.msra.mxu0 0
      %1418 = vmatprep.subr.bf16.mxu0 0
      %1419 = vmatpush1.bf16.msra.mxu0 0
      %1420 = vmatprep.subr.bf16.mxu0 0
      %1421 = vmatpush1.bf16.msra.mxu0 0
      %1422 = vmatprep.subr.bf16.mxu0 0
      %1423 = vmatpush1.bf16.msra.mxu0 0
      %1424 = vmatprep.subr.bf16.mxu0 0
      %1425 = vmatpush1.bf16.msra.mxu0 0
      %1426 = vmatprep.subr.bf16.mxu0 0
      %1427 = vmatpush1.bf16.msra.mxu0 0
      %1428 = vmatprep.subr.bf16.mxu0 0
      %1429 = vmatpush1.bf16.msra.mxu0 0
      %1430 = vmatprep.subr.bf16.mxu0 0
      %1431 = vmatpush1.bf16.msra.mxu0 0
      %1432 = vmatprep.subr.bf16.mxu0 0
      %1433 = vmatpush1.bf16.msra.mxu0 0
      %1434 = vmatprep.subr.bf16.mxu0 0
      %1435 = vmatpush1.bf16.msra.mxu0 0
      %1436 = vmatprep.mubr.bf16.mxu0 0
      %1437 = vmatmul.mubr.bf16.gmra.mrb[0].mxu0 %v1390
      %v1438 = vpop.f32.mrb[0].mxu0
      %v1439 = vadd.f32 0.0, %v1438
      %v1440 = vpop.f32.mrb[0].mxu0
      %v1441 = vpop.f32.mrb[0].mxu0
      %v1442 = vadd.f32 0.0, %v1441
      %v1443 = vpop.f32.mrb[0].mxu0
      %1444 = vmatprep.mubr.bf16.mxu0 0
      %1445 = vmatmul.mubr.bf16.gmra.mrb[0].mxu0 %v1393
      %v1446 = vpop.f32.mrb[0].mxu0
      %v1447 = vadd.f32 0.0, %v1446
      %v1448 = vpop.f32.mrb[0].mxu0
      %v1449 = vpop.f32.mrb[0].mxu0
      %v1450 = vadd.f32 0.0, %v1449
      %v1451 = vpop.f32.mrb[0].mxu0
      %1452 = vmatprep.mubr.bf16.mxu0 0
      %1453 = vmatmul.mubr.bf16.gmra.mrb[0].mxu0 %v1396
      %v1454 = vpop.f32.mrb[0].mxu0
      %v1455 = vadd.f32 0.0, %v1454
      %v1456 = vpop.f32.mrb[0].mxu0
      %v1457 = vpop.f32.mrb[0].mxu0
      %v1458 = vadd.f32 0.0, %v1457
      %v1459 = vpop.f32.mrb[0].mxu0
      %1460 = vmatprep.mubr.bf16.mxu0 0
      %1461 = vmatmul.mubr.bf16.gmra.mrb[0].mxu0 %v1399
      %v1462 = vpop.f32.mrb[0].mxu0
      %v1463 = vadd.f32 0.0, %v1462
      %v1464 = vpop.f32.mrb[0].mxu0
      %v1465 = vpop.f32.mrb[0].mxu0
      %v1466 = vadd.f32 0.0, %v1465
      %v1467 = vpop.f32.mrb[0].mxu0
      %1468 = vmatprep.mubr.bf16.mxu0 0
      %1469 = vmatmul.mubr.bf16.gmra.mrb[0].mxu0 %v1402
      %v1470 = vpop.f32.mrb[0].mxu0
      %v1471 = vadd.f32 0.0, %v1470
      %v1472 = vpop.f32.mrb[0].mxu0
      %v1473 = vpop.f32.mrb[0].mxu0
      %v1474 = vadd.f32 0.0, %v1473
      %v1475 = vpop.f32.mrb[0].mxu0
      %1476 = vdwg.mxu0
      %v1477 = vld [vmem:[#allocation2] sm:$0xff]
      %v1478 = vld [vmem:[#allocation2 + $0x8] sm:$0xff]
      %v1479 = vld [vmem:[#allocation2 + $0x10] sm:$0xff]
      %v1480 = vld [vmem:[#allocation2 + $0x18] sm:$0xff]
      %v1481 = vld [vmem:[#allocation2 + $0x20] sm:$0xff]
      %v1482 = vld [vmem:[#allocation2 + $0x28] sm:$0xff]
      %v1483 = vld [vmem:[#allocation2 + $0x30] sm:$0xff]
      %v1484 = vld [vmem:[#allocation2 + $0x38] sm:$0xff]
      %v1485 = vld [vmem:[#allocation2 + $0x40] sm:$0xff]
      %v1486 = vld [vmem:[#allocation2 + $0x48] sm:$0x3f]
      %v1487 = vadd.f32 %v1477, %v1439
      %v1488 = vadd.f32 %v1478, %v1442
      %v1489 = vadd.f32 %v1479, %v1447
      %v1490 = vadd.f32 %v1480, %v1450
      %v1491 = vadd.f32 %v1481, %v1455
      %v1492 = vadd.f32 %v1482, %v1458
      %v1493 = vadd.f32 %v1483, %v1463
      %v1494 = vadd.f32 %v1484, %v1466
      %v1495 = vadd.f32 %v1485, %v1471
      %v1496 = vadd.f32 %v1486, %v1474
      %1497 = vst.msk [vmem:[#allocation2] sm:$0xff] %vm348, %v1487
      %1498 = vst.msk [vmem:[#allocation2 + $0x8] sm:$0xff] %vm348, %v1488
      %1499 = vst.msk [vmem:[#allocation2 + $0x10] sm:$0xff] %vm348, %v1489
      %1500 = vst.msk [vmem:[#allocation2 + $0x18] sm:$0xff] %vm348, %v1490
      %1501 = vst.msk [vmem:[#allocation2 + $0x20] sm:$0xff] %vm348, %v1491
      %1502 = vst.msk [vmem:[#allocation2 + $0x28] sm:$0xff] %vm348, %v1492
      %1503 = vst.msk [vmem:[#allocation2 + $0x30] sm:$0xff] %vm348, %v1493
      %1504 = vst.msk [vmem:[#allocation2 + $0x38] sm:$0xff] %vm348, %v1494
      %1505 = vst.msk [vmem:[#allocation2 + $0x40] sm:$0xff] %vm348, %v1495
      %1506 = vst.msk [vmem:[#allocation2 + $0x48] sm:$0x3f] %vm446, %v1496
      %v1507 = vld [vmem:[%s256 + $0x8] sm:$0xc]
      %v1508 = vld [vmem:[%s256 + $0xc] sm:$0xf]
      %v1509 = vld [vmem:[%s256 + $0x10] sm:$0xf]
      %v1510 = vld [vmem:[%s256 + $0x14] sm:$0xf]
      %v1511 = vld [vmem:[%s256 + $0x18] sm:$0xf]
      %v1512 = vld [vmem:[%s256 + $0x1c] sm:$0xf]
      %v1513 = vld [vmem:[%s256 + $0x20] sm:$0xf]
      %v1514 = vld [vmem:[%s256 + $0x24] sm:$0xf]
      %v1515 = vld [vmem:[%s256 + $0x28] sm:$0xf]
      %v1516 = vld [vmem:[%s256 + $0x2c] sm:$0xf]
      %v1517 = vld [vmem:[%s256 + $0x30] sm:$0x1]
      %s1518 = scalar_lea.vmem %s260, 192
      %v1519 = vld [vmem:[%s1518] sm:$0xf]
      %v1520 = vld [vmem:[%s1518 + $0x4] sm:$0xf]
      %v1521 = vld [vmem:[%s1518 + $0x8] sm:$0xf]
      %v1522 = vld [vmem:[%s1518 + $0xc] sm:$0xf]
      %v1523 = vld [vmem:[%s1518 + $0x10] sm:$0xf]
      %v1524 = vld [vmem:[%s1518 + $0x14] sm:$0xf]
      %v1525 = vld [vmem:[%s1518 + $0x18] sm:$0xf]
      %v1526 = vld [vmem:[%s1518 + $0x1c] sm:$0xf]
      %v1538 = vunpack.c.l.b16 %v1507
      %v1539 = vunpack.c.l.b16 %v1508
      %v1540 = vunpack.c.l.b16 %v1509
      %v1541 = vunpack.c.l.b16 %v1510
      %v1542 = vunpack.c.l.b16 %v1511
      %v1543 = vunpack.c.l.b16 %v1512
      %v1544 = vunpack.c.l.b16 %v1513
      %v1545 = vunpack.c.l.b16 %v1514
      %v1546 = vunpack.c.l.b16 %v1515
      %v1547 = vunpack.c.l.b16 %v1516
      %v1548 = vunpack.c.l.b16 %v1517
      %v1549 = vpack.c.b16 %v1539, %v1538
      %v1550 = vpack.c.b16 %v1541, %v1540
      %v1551 = vpack.c.b16 %v1543, %v1542
      %v1552 = vpack.c.b16 %v1545, %v1544
      %v1553 = vpack.c.b16 %v1547, %v1546
      %v1554 = vpack.c.b16 %v1548, %v1548
      %v1555 = vrot.slane %v1549, 2
      %v1556 = vrot.slane %v1550, 2
      %v1557 = vsel %vm1353, %v1555, %v1556
      %v1558 = vrot.slane %v1551, 2
      %v1559 = vsel %vm1353, %v1556, %v1558
      %v1560 = vrot.slane %v1552, 2
      %v1561 = vsel %vm1353, %v1558, %v1560
      %v1562 = vrot.slane %v1553, 2
      %v1563 = vsel %vm1353, %v1560, %v1562
      %v1564 = vrot.slane %v1554, 2
      %v1565 = vsel %vm1353, %v1562, %v1564
      %v1574 = vunpack.c.l.b16 %v1519
      %v1575 = vunpack.c.l.b16 %v1520
      %v1576 = vunpack.c.l.b16 %v1521
      %v1577 = vunpack.c.l.b16 %v1522
      %v1578 = vunpack.c.l.b16 %v1523
      %v1579 = vunpack.c.l.b16 %v1524
      %v1580 = vunpack.c.l.b16 %v1525
      %v1581 = vunpack.c.l.b16 %v1526
      %v1582 = vpack.c.b16 %v1575, %v1574
      %v1583 = vpack.c.b16 %v1577, %v1576
      %v1584 = vpack.c.b16 %v1579, %v1578
      %v1585 = vpack.c.b16 %v1581, %v1580
      %v1591 = vsel %vm348, %v1557, 0
      %v1594 = vsel %vm348, %v1559, 0
      %v1597 = vsel %vm348, %v1561, 0
      %v1600 = vsel %vm348, %v1563, 0
      %v1603 = vsel %vm348, %v1565, 0
      %1605 = vmatprep.subr.bf16.mxu0 0
      %1606 = vmatpush1.bf16.msra.mxu0 %v1582
      %1607 = vmatprep.subr.bf16.mxu0 0
      %1608 = vmatpush1.bf16.msra.mxu0 %v1583
      %1609 = vmatprep.subr.bf16.mxu0 0
      %1610 = vmatpush1.bf16.msra.mxu0 %v1584
      %1611 = vmatprep.subr.bf16.mxu0 0
      %1612 = vmatpush1.bf16.msra.mxu0 %v1585
      %1613 = vmatprep.subr.bf16.mxu0 0
      %1614 = vmatpush1.bf16.msra.mxu0 0
      %1615 = vmatprep.subr.bf16.mxu0 0
      %1616 = vmatpush1.bf16.msra.mxu0 0
      %1617 = vmatprep.subr.bf16.mxu0 0
      %1618 = vmatpush1.bf16.msra.mxu0 0
      %1619 = vmatprep.subr.bf16.mxu0 0
      %1620 = vmatpush1.bf16.msra.mxu0 0
      %1621 = vmatprep.subr.bf16.mxu0 0
      %1622 = vmatpush1.bf16.msra.mxu0 0
      %1623 = vmatprep.subr.bf16.mxu0 0
      %1624 = vmatpush1.bf16.msra.mxu0 0
      %1625 = vmatprep.subr.bf16.mxu0 0
      %1626 = vmatpush1.bf16.msra.mxu0 0
      %1627 = vmatprep.subr.bf16.mxu0 0
      %1628 = vmatpush1.bf16.msra.mxu0 0
      %1629 = vmatprep.subr.bf16.mxu0 0
      %1630 = vmatpush1.bf16.msra.mxu0 0
      %1631 = vmatprep.subr.bf16.mxu0 0
      %1632 = vmatpush1.bf16.msra.mxu0 0
      %1633 = vmatprep.subr.bf16.mxu0 0
      %1634 = vmatpush1.bf16.msra.mxu0 0
      %1635 = vmatprep.subr.bf16.mxu0 0
      %1636 = vmatpush1.bf16.msra.mxu0 0
      %1637 = vmatprep.mubr.bf16.mxu0 0
      %1638 = vmatmul.mubr.bf16.gmra.mrb[0].mxu0 %v1591
      %v1639 = vpop.f32.mrb[0].mxu0
      %v1640 = vadd.f32 0.0, %v1639
      %v1641 = vpop.f32.mrb[0].mxu0
      %v1642 = vpop.f32.mrb[0].mxu0
      %v1643 = vadd.f32 0.0, %v1642
      %v1644 = vpop.f32.mrb[0].mxu0
      %1645 = vmatprep.mubr.bf16.mxu0 0
      %1646 = vmatmul.mubr.bf16.gmra.mrb[0].mxu0 %v1594
      %v1647 = vpop.f32.mrb[0].mxu0
      %v1648 = vadd.f32 0.0, %v1647
      %v1649 = vpop.f32.mrb[0].mxu0
      %v1650 = vpop.f32.mrb[0].mxu0
      %v1651 = vadd.f32 0.0, %v1650
      %v1652 = vpop.f32.mrb[0].mxu0
      %1653 = vmatprep.mubr.bf16.mxu0 0
      %1654 = vmatmul.mubr.bf16.gmra.mrb[0].mxu0 %v1597
      %v1655 = vpop.f32.mrb[0].mxu0
      %v1656 = vadd.f32 0.0, %v1655
      %v1657 = vpop.f32.mrb[0].mxu0
      %v1658 = vpop.f32.mrb[0].mxu0
      %v1659 = vadd.f32 0.0, %v1658
      %v1660 = vpop.f32.mrb[0].mxu0
      %1661 = vmatprep.mubr.bf16.mxu0 0
      %1662 = vmatmul.mubr.bf16.gmra.mrb[0].mxu0 %v1600
      %v1663 = vpop.f32.mrb[0].mxu0
      %v1664 = vadd.f32 0.0, %v1663
      %v1665 = vpop.f32.mrb[0].mxu0
      %v1666 = vpop.f32.mrb[0].mxu0
      %v1667 = vadd.f32 0.0, %v1666
      %v1668 = vpop.f32.mrb[0].mxu0
      %1669 = vmatprep.mubr.bf16.mxu0 0
      %1670 = vmatmul.mubr.bf16.gmra.mrb[0].mxu0 %v1603
      %v1671 = vpop.f32.mrb[0].mxu0
      %v1672 = vadd.f32 0.0, %v1671
      %v1673 = vpop.f32.mrb[0].mxu0
      %v1674 = vpop.f32.mrb[0].mxu0
      %v1675 = vadd.f32 0.0, %v1674
      %v1676 = vpop.f32.mrb[0].mxu0
      %1677 = vdwg.mxu0
      %v1678 = vld [vmem:[#allocation2] sm:$0xff]
      %v1679 = vld [vmem:[#allocation2 + $0x8] sm:$0xff]
      %v1680 = vld [vmem:[#allocation2 + $0x10] sm:$0xff]
      %v1681 = vld [vmem:[#allocation2 + $0x18] sm:$0xff]
      %v1682 = vld [vmem:[#allocation2 + $0x20] sm:$0xff]
      %v1683 = vld [vmem:[#allocation2 + $0x28] sm:$0xff]
      %v1684 = vld [vmem:[#allocation2 + $0x30] sm:$0xff]
      %v1685 = vld [vmem:[#allocation2 + $0x38] sm:$0xff]
      %v1686 = vld [vmem:[#allocation2 + $0x40] sm:$0xff]
      %v1687 = vld [vmem:[#allocation2 + $0x48] sm:$0x3f]
      %v1688 = vadd.f32 %v1678, %v1640
      %v1689 = vadd.f32 %v1679, %v1643
      %v1690 = vadd.f32 %v1680, %v1648
      %v1691 = vadd.f32 %v1681, %v1651
      %v1692 = vadd.f32 %v1682, %v1656
      %v1693 = vadd.f32 %v1683, %v1659
      %v1694 = vadd.f32 %v1684, %v1664
      %v1695 = vadd.f32 %v1685, %v1667
      %v1696 = vadd.f32 %v1686, %v1672
      %v1697 = vadd.f32 %v1687, %v1675
      %1698 = vst.msk [vmem:[#allocation2] sm:$0xff] %vm348, %v1688
      %1699 = vst.msk [vmem:[#allocation2 + $0x8] sm:$0xff] %vm348, %v1689
      %1700 = vst.msk [vmem:[#allocation2 + $0x10] sm:$0xff] %vm348, %v1690
      %1701 = vst.msk [vmem:[#allocation2 + $0x18] sm:$0xff] %vm348, %v1691
      %1702 = vst.msk [vmem:[#allocation2 + $0x20] sm:$0xff] %vm348, %v1692
      %1703 = vst.msk [vmem:[#allocation2 + $0x28] sm:$0xff] %vm348, %v1693
      %1704 = vst.msk [vmem:[#allocation2 + $0x30] sm:$0xff] %vm348, %v1694
      %1705 = vst.msk [vmem:[#allocation2 + $0x38] sm:$0xff] %vm348, %v1695
      %1706 = vst.msk [vmem:[#allocation2 + $0x40] sm:$0xff] %vm348, %v1696
      %1707 = vst.msk [vmem:[#allocation2 + $0x48] sm:$0x3f] %vm446, %v1697
      %v1708 = vld [vmem:[%s256 + $0x8] sm:$0xc]
      %v1709 = vld [vmem:[%s256 + $0xc] sm:$0xf]
      %v1710 = vld [vmem:[%s256 + $0x10] sm:$0xf]
      %v1711 = vld [vmem:[%s256 + $0x14] sm:$0xf]
      %v1712 = vld [vmem:[%s256 + $0x18] sm:$0xf]
      %v1713 = vld [vmem:[%s256 + $0x1c] sm:$0xf]
      %v1714 = vld [vmem:[%s256 + $0x20] sm:$0xf]
      %v1715 = vld [vmem:[%s256 + $0x24] sm:$0xf]
      %v1716 = vld [vmem:[%s256 + $0x28] sm:$0xf]
      %v1717 = vld [vmem:[%s256 + $0x2c] sm:$0xf]
      %v1718 = vld [vmem:[%s256 + $0x30] sm:$0x3]
      %s1719 = scalar_lea.vmem %s260, 224
      %v1720 = vld [vmem:[%s1719] sm:$0xf]
      %v1721 = vld [vmem:[%s1719 + $0x4] sm:$0xf]
      %v1722 = vld [vmem:[%s1719 + $0x8] sm:$0xf]
      %v1723 = vld [vmem:[%s1719 + $0xc] sm:$0xf]
      %v1724 = vld [vmem:[%s1719 + $0x10] sm:$0xf]
      %v1725 = vld [vmem:[%s1719 + $0x14] sm:$0xf]
      %v1726 = vld [vmem:[%s1719 + $0x18] sm:$0xf]
      %v1727 = vld [vmem:[%s1719 + $0x1c] sm:$0xf]
      %v1739 = vunpack.c.l.b16 %v1708
      %v1740 = vunpack.c.l.b16 %v1709
      %v1741 = vunpack.c.l.b16 %v1710
      %v1742 = vunpack.c.l.b16 %v1711
      %v1743 = vunpack.c.l.b16 %v1712
      %v1744 = vunpack.c.l.b16 %v1713
      %v1745 = vunpack.c.l.b16 %v1714
      %v1746 = vunpack.c.l.b16 %v1715
      %v1747 = vunpack.c.l.b16 %v1716
      %v1748 = vunpack.c.l.b16 %v1717
      %v1749 = vunpack.c.l.b16 %v1718
      %v1750 = vpack.c.b16 %v1740, %v1739
      %v1751 = vpack.c.b16 %v1742, %v1741
      %v1752 = vpack.c.b16 %v1744, %v1743
      %v1753 = vpack.c.b16 %v1746, %v1745
      %v1754 = vpack.c.b16 %v1748, %v1747
      %v1755 = vpack.c.b16 %v1749, %v1749
      %vm1756 = vsmask.f32 5376
      %v1758 = vshrl.u32 %v1750, 16
      %v1760 = vrot.slane %v1758, 2
      %v1761 = vshll.u32 %v1750, 16
      %v1763 = vrot.slane %v1761, 3
      %v1764 = vor.u32 %v1760, %v1763
      %v1766 = vshrl.u32 %v1751, 16
      %v1768 = vrot.slane %v1766, 2
      %v1769 = vshll.u32 %v1751, 16
      %v1771 = vrot.slane %v1769, 3
      %v1772 = vor.u32 %v1768, %v1771
      %v1773 = vsel %vm1756, %v1764, %v1772
      %v1775 = vshrl.u32 %v1752, 16
      %v1777 = vrot.slane %v1775, 2
      %v1778 = vshll.u32 %v1752, 16
      %v1780 = vrot.slane %v1778, 3
      %v1781 = vor.u32 %v1777, %v1780
      %v1782 = vsel %vm1756, %v1772, %v1781
      %v1784 = vshrl.u32 %v1753, 16
      %v1786 = vrot.slane %v1784, 2
      %v1787 = vshll.u32 %v1753, 16
      %v1789 = vrot.slane %v1787, 3
      %v1790 = vor.u32 %v1786, %v1789
      %v1791 = vsel %vm1756, %v1781, %v1790
      %v1793 = vshrl.u32 %v1754, 16
      %v1795 = vrot.slane %v1793, 2
      %v1796 = vshll.u32 %v1754, 16
      %v1798 = vrot.slane %v1796, 3
      %v1799 = vor.u32 %v1795, %v1798
      %v1800 = vsel %vm1756, %v1790, %v1799
      %v1802 = vshrl.u32 %v1755, 16
      %v1804 = vrot.slane %v1802, 2
      %v1805 = vshll.u32 %v1755, 16
      %v1807 = vrot.slane %v1805, 3
      %v1808 = vor.u32 %v1804, %v1807
      %v1809 = vsel %vm1756, %v1799, %v1808
      %v1818 = vunpack.c.l.b16 %v1720
      %v1819 = vunpack.c.l.b16 %v1721
      %v1820 = vunpack.c.l.b16 %v1722
      %v1821 = vunpack.c.l.b16 %v1723
      %v1822 = vunpack.c.l.b16 %v1724
      %v1823 = vunpack.c.l.b16 %v1725
      %v1824 = vunpack.c.l.b16 %v1726
      %v1825 = vunpack.c.l.b16 %v1727
      %v1826 = vpack.c.b16 %v1819, %v1818
      %v1827 = vpack.c.b16 %v1821, %v1820
      %v1828 = vpack.c.b16 %v1823, %v1822
      %v1829 = vpack.c.b16 %v1825, %v1824
      %v1835 = vsel %vm348, %v1773, 0
      %v1838 = vsel %vm348, %v1782, 0
      %v1841 = vsel %vm348, %v1791, 0
      %v1844 = vsel %vm348, %v1800, 0
      %v1847 = vsel %vm348, %v1809, 0
      %1849 = vmatprep.subr.bf16.mxu0 0
      %1850 = vmatpush1.bf16.msra.mxu0 %v1826
      %1851 = vmatprep.subr.bf16.mxu0 0
      %1852 = vmatpush1.bf16.msra.mxu0 %v1827
      %1853 = vmatprep.subr.bf16.mxu0 0
      %1854 = vmatpush1.bf16.msra.mxu0 %v1828
      %1855 = vmatprep.subr.bf16.mxu0 0
      %1856 = vmatpush1.bf16.msra.mxu0 %v1829
      %1857 = vmatprep.subr.bf16.mxu0 0
      %1858 = vmatpush1.bf16.msra.mxu0 0
      %1859 = vmatprep.subr.bf16.mxu0 0
      %1860 = vmatpush1.bf16.msra.mxu0 0
      %1861 = vmatprep.subr.bf16.mxu0 0
      %1862 = vmatpush1.bf16.msra.mxu0 0
      %1863 = vmatprep.subr.bf16.mxu0 0
      %1864 = vmatpush1.bf16.msra.mxu0 0
      %1865 = vmatprep.subr.bf16.mxu0 0
      %1866 = vmatpush1.bf16.msra.mxu0 0
      %1867 = vmatprep.subr.bf16.mxu0 0
      %1868 = vmatpush1.bf16.msra.mxu0 0
      %1869 = vmatprep.subr.bf16.mxu0 0
      %1870 = vmatpush1.bf16.msra.mxu0 0
      %1871 = vmatprep.subr.bf16.mxu0 0
      %1872 = vmatpush1.bf16.msra.mxu0 0
      %1873 = vmatprep.subr.bf16.mxu0 0
      %1874 = vmatpush1.bf16.msra.mxu0 0
      %1875 = vmatprep.subr.bf16.mxu0 0
      %1876 = vmatpush1.bf16.msra.mxu0 0
      %1877 = vmatprep.subr.bf16.mxu0 0
      %1878 = vmatpush1.bf16.msra.mxu0 0
      %1879 = vmatprep.subr.bf16.mxu0 0
      %1880 = vmatpush1.bf16.msra.mxu0 0
      %1881 = vmatprep.mubr.bf16.mxu0 0
      %1882 = vmatmul.mubr.bf16.gmra.mrb[0].mxu0 %v1835
      %v1883 = vpop.f32.mrb[0].mxu0
      %v1884 = vadd.f32 0.0, %v1883
      %v1885 = vpop.f32.mrb[0].mxu0
      %v1886 = vpop.f32.mrb[0].mxu0
      %v1887 = vadd.f32 0.0, %v1886
      %v1888 = vpop.f32.mrb[0].mxu0
      %1889 = vmatprep.mubr.bf16.mxu0 0
      %1890 = vmatmul.mubr.bf16.gmra.mrb[0].mxu0 %v1838
      %v1891 = vpop.f32.mrb[0].mxu0
      %v1892 = vadd.f32 0.0, %v1891
      %v1893 = vpop.f32.mrb[0].mxu0
      %v1894 = vpop.f32.mrb[0].mxu0
      %v1895 = vadd.f32 0.0, %v1894
      %v1896 = vpop.f32.mrb[0].mxu0
      %1897 = vmatprep.mubr.bf16.mxu0 0
      %1898 = vmatmul.mubr.bf16.gmra.mrb[0].mxu0 %v1841
      %v1899 = vpop.f32.mrb[0].mxu0
      %v1900 = vadd.f32 0.0, %v1899
      %v1901 = vpop.f32.mrb[0].mxu0
      %v1902 = vpop.f32.mrb[0].mxu0
      %v1903 = vadd.f32 0.0, %v1902
      %v1904 = vpop.f32.mrb[0].mxu0
      %1905 = vmatprep.mubr.bf16.mxu0 0
      %1906 = vmatmul.mubr.bf16.gmra.mrb[0].mxu0 %v1844
      %v1907 = vpop.f32.mrb[0].mxu0
      %v1908 = vadd.f32 0.0, %v1907
      %v1909 = vpop.f32.mrb[0].mxu0
      %v1910 = vpop.f32.mrb[0].mxu0
      %v1911 = vadd.f32 0.0, %v1910
      %v1912 = vpop.f32.mrb[0].mxu0
      %1913 = vmatprep.mubr.bf16.mxu0 0
      %1914 = vmatmul.mubr.bf16.gmra.mrb[0].mxu0 %v1847
      %v1915 = vpop.f32.mrb[0].mxu0
      %v1916 = vadd.f32 0.0, %v1915
      %v1917 = vpop.f32.mrb[0].mxu0
      %v1918 = vpop.f32.mrb[0].mxu0
      %v1919 = vadd.f32 0.0, %v1918
      %v1920 = vpop.f32.mrb[0].mxu0
      %1921 = vdwg.mxu0
      %v1922 = vld [vmem:[#allocation2] sm:$0xff]
      %v1923 = vld [vmem:[#allocation2 + $0x8] sm:$0xff]
      %v1924 = vld [vmem:[#allocation2 + $0x10] sm:$0xff]
      %v1925 = vld [vmem:[#allocation2 + $0x18] sm:$0xff]
      %v1926 = vld [vmem:[#allocation2 + $0x20] sm:$0xff]
      %v1927 = vld [vmem:[#allocation2 + $0x28] sm:$0xff]
      %v1928 = vld [vmem:[#allocation2 + $0x30] sm:$0xff]
      %v1929 = vld [vmem:[#allocation2 + $0x38] sm:$0xff]
      %v1930 = vld [vmem:[#allocation2 + $0x40] sm:$0xff]
      %v1931 = vld [vmem:[#allocation2 + $0x48] sm:$0x3f]
      %v1932 = vadd.f32 %v1922, %v1884
      %v1933 = vadd.f32 %v1923, %v1887
      %v1934 = vadd.f32 %v1924, %v1892
      %v1935 = vadd.f32 %v1925, %v1895
      %v1936 = vadd.f32 %v1926, %v1900
      %v1937 = vadd.f32 %v1927, %v1903
      %v1938 = vadd.f32 %v1928, %v1908
      %v1939 = vadd.f32 %v1929, %v1911
      %v1940 = vadd.f32 %v1930, %v1916
      %v1941 = vadd.f32 %v1931, %v1919
      %1942 = vst.msk [vmem:[#allocation2] sm:$0xff] %vm348, %v1932
      %1943 = vst.msk [vmem:[#allocation2 + $0x8] sm:$0xff] %vm348, %v1933
      %1944 = vst.msk [vmem:[#allocation2 + $0x10] sm:$0xff] %vm348, %v1934
      %1945 = vst.msk [vmem:[#allocation2 + $0x18] sm:$0xff] %vm348, %v1935
      %1946 = vst.msk [vmem:[#allocation2 + $0x20] sm:$0xff] %vm348, %v1936
      %1947 = vst.msk [vmem:[#allocation2 + $0x28] sm:$0xff] %vm348, %v1937
      %1948 = vst.msk [vmem:[#allocation2 + $0x30] sm:$0xff] %vm348, %v1938
      %1949 = vst.msk [vmem:[#allocation2 + $0x38] sm:$0xff] %vm348, %v1939
      %1950 = vst.msk [vmem:[#allocation2 + $0x40] sm:$0xff] %vm348, %v1940
      %1951 = vst.msk [vmem:[#allocation2 + $0x48] sm:$0x3f] %vm446, %v1941
      %v1952 = vld [vmem:[%s256 + $0x8] sm:$0x8]
      %v1953 = vld [vmem:[%s256 + $0xc] sm:$0xf]
      %v1954 = vld [vmem:[%s256 + $0x10] sm:$0xf]
      %v1955 = vld [vmem:[%s256 + $0x14] sm:$0xf]
      %v1956 = vld [vmem:[%s256 + $0x18] sm:$0xf]
      %v1957 = vld [vmem:[%s256 + $0x1c] sm:$0xf]
      %v1958 = vld [vmem:[%s256 + $0x20] sm:$0xf]
      %v1959 = vld [vmem:[%s256 + $0x24] sm:$0xf]
      %v1960 = vld [vmem:[%s256 + $0x28] sm:$0xf]
      %v1961 = vld [vmem:[%s256 + $0x2c] sm:$0xf]
      %v1962 = vld [vmem:[%s256 + $0x30] sm:$0x3]
      %s1963 = scalar_lea.vmem %s260, 256
      %v1964 = vld [vmem:[%s1963] sm:$0xf]
      %v1965 = vld [vmem:[%s1963 + $0x4] sm:$0xf]
      %v1966 = vld [vmem:[%s1963 + $0x8] sm:$0xf]
      %v1967 = vld [vmem:[%s1963 + $0xc] sm:$0xf]
      %v1968 = vld [vmem:[%s1963 + $0x10] sm:$0xf]
      %v1969 = vld [vmem:[%s1963 + $0x14] sm:$0xf]
      %v1970 = vld [vmem:[%s1963 + $0x18] sm:$0xf]
      %v1971 = vld [vmem:[%s1963 + $0x1c] sm:$0xf]
      %v1983 = vunpack.c.l.b16 %v1952
      %v1984 = vunpack.c.l.b16 %v1953
      %v1985 = vunpack.c.l.b16 %v1954
      %v1986 = vunpack.c.l.b16 %v1955
      %v1987 = vunpack.c.l.b16 %v1956
      %v1988 = vunpack.c.l.b16 %v1957
      %v1989 = vunpack.c.l.b16 %v1958
      %v1990 = vunpack.c.l.b16 %v1959
      %v1991 = vunpack.c.l.b16 %v1960
      %v1992 = vunpack.c.l.b16 %v1961
      %v1993 = vunpack.c.l.b16 %v1962
      %v1994 = vpack.c.b16 %v1984, %v1983
      %v1995 = vpack.c.b16 %v1986, %v1985
      %v1996 = vpack.c.b16 %v1988, %v1987
      %v1997 = vpack.c.b16 %v1990, %v1989
      %v1998 = vpack.c.b16 %v1992, %v1991
      %v1999 = vpack.c.b16 %v1993, %v1993
      %vm2000 = vcmask 1044480
      %v2001 = vrot.slane %v1994, 3
      %v2002 = vrot.slane %v1995, 3
      %v2003 = vsel %vm2000, %v2001, %v2002
      %v2004 = vrot.slane %v1996, 3
      %v2005 = vsel %vm2000, %v2002, %v2004
      %v2006 = vrot.slane %v1997, 3
      %v2007 = vsel %vm2000, %v2004, %v2006
      %v2008 = vrot.slane %v1998, 3
      %v2009 = vsel %vm2000, %v2006, %v2008
      %v2010 = vrot.slane %v1999, 3
      %v2011 = vsel %vm2000, %v2008, %v2010
      %v2020 = vunpack.c.l.b16 %v1964
      %v2021 = vunpack.c.l.b16 %v1965
      %v2022 = vunpack.c.l.b16 %v1966
      %v2023 = vunpack.c.l.b16 %v1967
      %v2024 = vunpack.c.l.b16 %v1968
      %v2025 = vunpack.c.l.b16 %v1969
      %v2026 = vunpack.c.l.b16 %v1970
      %v2027 = vunpack.c.l.b16 %v1971
      %v2028 = vpack.c.b16 %v2021, %v2020
      %v2029 = vpack.c.b16 %v2023, %v2022
      %v2030 = vpack.c.b16 %v2025, %v2024
      %v2031 = vpack.c.b16 %v2027, %v2026
      %v2037 = vsel %vm348, %v2003, 0
      %v2040 = vsel %vm348, %v2005, 0
      %v2043 = vsel %vm348, %v2007, 0
      %v2046 = vsel %vm348, %v2009, 0
      %v2049 = vsel %vm348, %v2011, 0
      %2051 = vmatprep.subr.bf16.mxu0 0
      %2052 = vmatpush1.bf16.msra.mxu0 %v2028
      %2053 = vmatprep.subr.bf16.mxu0 0
      %2054 = vmatpush1.bf16.msra.mxu0 %v2029
      %2055 = vmatprep.subr.bf16.mxu0 0
      %2056 = vmatpush1.bf16.msra.mxu0 %v2030
      %2057 = vmatprep.subr.bf16.mxu0 0
      %2058 = vmatpush1.bf16.msra.mxu0 %v2031
      %2059 = vmatprep.subr.bf16.mxu0 0
      %2060 = vmatpush1.bf16.msra.mxu0 0
      %2061 = vmatprep.subr.bf16.mxu0 0
      %2062 = vmatpush1.bf16.msra.mxu0 0
      %2063 = vmatprep.subr.bf16.mxu0 0
      %2064 = vmatpush1.bf16.msra.mxu0 0
      %2065 = vmatprep.subr.bf16.mxu0 0
      %2066 = vmatpush1.bf16.msra.mxu0 0
      %2067 = vmatprep.subr.bf16.mxu0 0
      %2068 = vmatpush1.bf16.msra.mxu0 0
      %2069 = vmatprep.subr.bf16.mxu0 0
      %2070 = vmatpush1.bf16.msra.mxu0 0
      %2071 = vmatprep.subr.bf16.mxu0 0
      %2072 = vmatpush1.bf16.msra.mxu0 0
      %2073 = vmatprep.subr.bf16.mxu0 0
      %2074 = vmatpush1.bf16.msra.mxu0 0
      %2075 = vmatprep.subr.bf16.mxu0 0
      %2076 = vmatpush1.bf16.msra.mxu0 0
      %2077 = vmatprep.subr.bf16.mxu0 0
      %2078 = vmatpush1.bf16.msra.mxu0 0
      %2079 = vmatprep.subr.bf16.mxu0 0
      %2080 = vmatpush1.bf16.msra.mxu0 0
      %2081 = vmatprep.subr.bf16.mxu0 0
      %2082 = vmatpush1.bf16.msra.mxu0 0
      %2083 = vmatprep.mubr.bf16.mxu0 0
      %2084 = vmatmul.mubr.bf16.gmra.mrb[0].mxu0 %v2037
      %v2085 = vpop.f32.mrb[0].mxu0
      %v2086 = vadd.f32 0.0, %v2085
      %v2087 = vpop.f32.mrb[0].mxu0
      %v2088 = vpop.f32.mrb[0].mxu0
      %v2089 = vadd.f32 0.0, %v2088
      %v2090 = vpop.f32.mrb[0].mxu0
      %2091 = vmatprep.mubr.bf16.mxu0 0
      %2092 = vmatmul.mubr.bf16.gmra.mrb[0].mxu0 %v2040
      %v2093 = vpop.f32.mrb[0].mxu0
      %v2094 = vadd.f32 0.0, %v2093
      %v2095 = vpop.f32.mrb[0].mxu0
      %v2096 = vpop.f32.mrb[0].mxu0
      %v2097 = vadd.f32 0.0, %v2096
      %v2098 = vpop.f32.mrb[0].mxu0
      %2099 = vmatprep.mubr.bf16.mxu0 0
      %2100 = vmatmul.mubr.bf16.gmra.mrb[0].mxu0 %v2043
      %v2101 = vpop.f32.mrb[0].mxu0
      %v2102 = vadd.f32 0.0, %v2101
      %v2103 = vpop.f32.mrb[0].mxu0
      %v2104 = vpop.f32.mrb[0].mxu0
      %v2105 = vadd.f32 0.0, %v2104
      %v2106 = vpop.f32.mrb[0].mxu0
      %2107 = vmatprep.mubr.bf16.mxu0 0
      %2108 = vmatmul.mubr.bf16.gmra.mrb[0].mxu0 %v2046
      %v2109 = vpop.f32.mrb[0].mxu0
      %v2110 = vadd.f32 0.0, %v2109
      %v2111 = vpop.f32.mrb[0].mxu0
      %v2112 = vpop.f32.mrb[0].mxu0
      %v2113 = vadd.f32 0.0, %v2112
      %v2114 = vpop.f32.mrb[0].mxu0
      %2115 = vmatprep.mubr.bf16.mxu0 0
      %2116 = vmatmul.mubr.bf16.gmra.mrb[0].mxu0 %v2049
      %v2117 = vpop.f32.mrb[0].mxu0
      %v2118 = vadd.f32 0.0, %v2117
      %v2119 = vpop.f32.mrb[0].mxu0
      %v2120 = vpop.f32.mrb[0].mxu0
      %v2121 = vadd.f32 0.0, %v2120
      %v2122 = vpop.f32.mrb[0].mxu0
      %2123 = vdwg.mxu0
      %v2124 = vld [vmem:[#allocation2] sm:$0xff]
      %v2125 = vld [vmem:[#allocation2 + $0x8] sm:$0xff]
      %v2126 = vld [vmem:[#allocation2 + $0x10] sm:$0xff]
      %v2127 = vld [vmem:[#allocation2 + $0x18] sm:$0xff]
      %v2128 = vld [vmem:[#allocation2 + $0x20] sm:$0xff]
      %v2129 = vld [vmem:[#allocation2 + $0x28] sm:$0xff]
      %v2130 = vld [vmem:[#allocation2 + $0x30] sm:$0xff]
      %v2131 = vld [vmem:[#allocation2 + $0x38] sm:$0xff]
      %v2132 = vld [vmem:[#allocation2 + $0x40] sm:$0xff]
      %v2133 = vld [vmem:[#allocation2 + $0x48] sm:$0x3f]
      %v2134 = vadd.f32 %v2124, %v2086
      %v2135 = vadd.f32 %v2125, %v2089
      %v2136 = vadd.f32 %v2126, %v2094
      %v2137 = vadd.f32 %v2127, %v2097
      %v2138 = vadd.f32 %v2128, %v2102
      %v2139 = vadd.f32 %v2129, %v2105
      %v2140 = vadd.f32 %v2130, %v2110
      %v2141 = vadd.f32 %v2131, %v2113
      %v2142 = vadd.f32 %v2132, %v2118
      %v2143 = vadd.f32 %v2133, %v2121
      %2144 = vst.msk [vmem:[#allocation2] sm:$0xff] %vm348, %v2134
      %2145 = vst.msk [vmem:[#allocation2 + $0x8] sm:$0xff] %vm348, %v2135
      %2146 = vst.msk [vmem:[#allocation2 + $0x10] sm:$0xff] %vm348, %v2136
      %2147 = vst.msk [vmem:[#allocation2 + $0x18] sm:$0xff] %vm348, %v2137
      %2148 = vst.msk [vmem:[#allocation2 + $0x20] sm:$0xff] %vm348, %v2138
      %2149 = vst.msk [vmem:[#allocation2 + $0x28] sm:$0xff] %vm348, %v2139
      %2150 = vst.msk [vmem:[#allocation2 + $0x30] sm:$0xff] %vm348, %v2140
      %2151 = vst.msk [vmem:[#allocation2 + $0x38] sm:$0xff] %vm348, %v2141
      %2152 = vst.msk [vmem:[#allocation2 + $0x40] sm:$0xff] %vm348, %v2142
      %2153 = vst.msk [vmem:[#allocation2 + $0x48] sm:$0x3f] %vm446, %v2143
      %v2154 = vld [vmem:[#allocation2] sm:$0xff]
      %v2155 = vld [vmem:[#allocation2 + $0x8] sm:$0xff]
      %v2156 = vld [vmem:[#allocation2 + $0x10] sm:$0xff]
      %v2157 = vld [vmem:[#allocation2 + $0x18] sm:$0xff]
      %v2158 = vld [vmem:[#allocation2 + $0x20] sm:$0xff]
      %v2159 = vld [vmem:[#allocation2 + $0x28] sm:$0xff]
      %v2160 = vld [vmem:[#allocation2 + $0x30] sm:$0xff]
      %v2161 = vld [vmem:[#allocation2 + $0x38] sm:$0xff]
      %v2162 = vld [vmem:[#allocation2 + $0x40] sm:$0xff]
      %v2163 = vld [vmem:[#allocation2 + $0x48] sm:$0x3f]
      %v2164 = vld [vmem:[%s263] sm:$0x1]
      %v2166 = vlaneseq
      %v2167 = vshrl.u32 %v2166, 7
      %v2168 = vsub.s32 0, %v2167
      %v2169 = vrot.slane %v2164, %v2168
      %v2171 = vadd.f32 %v2154, %v2169
      %v2172 = vadd.f32 %v2155, %v2169
      %v2173 = vadd.f32 %v2156, %v2169
      %v2174 = vadd.f32 %v2157, %v2169
      %v2175 = vadd.f32 %v2158, %v2169
      %v2176 = vadd.f32 %v2159, %v2169
      %v2177 = vadd.f32 %v2160, %v2169
      %v2178 = vadd.f32 %v2161, %v2169
      %v2179 = vadd.f32 %v2162, %v2169
      %v2180 = vadd.f32 %v2163, %v2169
      %v2181 = vld [vmem:[%s271] sm:$0xf]
      %v2182 = vld [vmem:[%s271 + $0x4] sm:$0xf]
      %v2183 = vld [vmem:[%s271 + $0x8] sm:$0xf]
      %v2184 = vld [vmem:[%s271 + $0xc] sm:$0xf]
      %v2185 = vld [vmem:[%s271 + $0x10] sm:$0xf]
      %v2186 = vld [vmem:[%s271 + $0x14] sm:$0xf]
      %v2187 = vld [vmem:[%s271 + $0x18] sm:$0xf]
      %v2188 = vld [vmem:[%s271 + $0x1c] sm:$0xf]
      %v2189 = vld [vmem:[%s271 + $0x20] sm:$0xf]
      %v2190 = vld [vmem:[%s271 + $0x24] sm:$0x7]
      %v2191 = vunpack.c.l.bf16 %v2181
      %v2192 = vunpack.c.l.bf16 %v2182
      %v2193 = vunpack.c.l.bf16 %v2183
      %v2194 = vunpack.c.l.bf16 %v2184
      %v2195 = vunpack.c.l.bf16 %v2185
      %v2196 = vunpack.c.l.bf16 %v2186
      %v2197 = vunpack.c.l.bf16 %v2187
      %v2198 = vunpack.c.l.bf16 %v2188
      %v2199 = vunpack.c.l.bf16 %v2189
      %v2200 = vunpack.c.l.bf16 %v2190
      %v2201 = vadd.f32 %v2171, %v2191
      %v2202 = vadd.f32 %v2172, %v2192
      %v2203 = vadd.f32 %v2173, %v2193
      %v2204 = vadd.f32 %v2174, %v2194
      %v2205 = vadd.f32 %v2175, %v2195
      %v2206 = vadd.f32 %v2176, %v2196
      %v2207 = vadd.f32 %v2177, %v2197
      %v2208 = vadd.f32 %v2178, %v2198
      %v2209 = vadd.f32 %v2179, %v2199
      %v2210 = vadd.f32 %v2180, %v2200
      %v2211 = vmax.f32 %v2201, 0.0
      %v2212 = vmax.f32 %v2202, 0.0
      %v2213 = vmax.f32 %v2203, 0.0
      %v2214 = vmax.f32 %v2204, 0.0
      %v2215 = vmax.f32 %v2205, 0.0
      %v2216 = vmax.f32 %v2206, 0.0
      %v2217 = vmax.f32 %v2207, 0.0
      %v2218 = vmax.f32 %v2208, 0.0
      %v2219 = vmax.f32 %v2209, 0.0
      %v2220 = vmax.f32 %v2210, 0.0
      %v2221 = vpack.c.bf16 %v2212, %v2211
      %v2222 = vpack.c.bf16 %v2214, %v2213
      %v2223 = vpack.c.bf16 %v2216, %v2215
      %v2224 = vpack.c.bf16 %v2218, %v2217
      %v2225 = vpack.c.bf16 %v2220, %v2219
      %v2231 = vunpack.c.l.b16 %v2221
      %v2232 = vunpack.c.h.b16 %v2221
      %v2233 = vunpack.c.l.b16 %v2222
      %v2234 = vunpack.c.h.b16 %v2222
      %v2235 = vunpack.c.l.b16 %v2223
      %v2236 = vunpack.c.h.b16 %v2223
      %v2237 = vunpack.c.l.b16 %v2224
      %v2238 = vunpack.c.h.b16 %v2224
      %v2239 = vunpack.c.l.b16 %v2225
      %v2240 = vunpack.c.h.b16 %v2225
      %v2241 = vpack.c.b16 %v2231, %v2231
      %v2242 = vpack.c.b16 %v2232, %v2232
      %v2243 = vpack.c.b16 %v2233, %v2233
      %v2244 = vpack.c.b16 %v2234, %v2234
      %v2245 = vpack.c.b16 %v2235, %v2235
      %v2246 = vpack.c.b16 %v2236, %v2236
      %v2247 = vpack.c.b16 %v2237, %v2237
      %v2248 = vpack.c.b16 %v2238, %v2238
      %v2249 = vpack.c.b16 %v2239, %v2239
      %v2250 = vpack.c.b16 %v2240, %v2240
      %vm2261 = vcmask 519168
      %2262 = vst.msk [vmem:[%s279] sm:$0xf] %vm2261, %v2241
      %2263 = vst.msk [vmem:[%s279 + $0x4] sm:$0xf] %vm2261, %v2242
      %2264 = vst.msk [vmem:[%s279 + $0x8] sm:$0xf] %vm2261, %v2243
      %2265 = vst.msk [vmem:[%s279 + $0xc] sm:$0xf] %vm2261, %v2244
      %2266 = vst.msk [vmem:[%s279 + $0x10] sm:$0xf] %vm2261, %v2245
      %2267 = vst.msk [vmem:[%s279 + $0x14] sm:$0xf] %vm2261, %v2246
      %2268 = vst.msk [vmem:[%s279 + $0x18] sm:$0xf] %vm2261, %v2247
      %2269 = vst.msk [vmem:[%s279 + $0x1c] sm:$0xf] %vm2261, %v2248
      %2270 = vst.msk [vmem:[%s279 + $0x20] sm:$0xf] %vm2261, %v2249
      %vm2271 = vcmask 518144
      %2272 = vst.msk [vmem:[%s279 + $0x24] sm:$0x7] %vm2271, %v2250
      %p2273 = scmp.lt.s32.totalorder %s20, 1
      %s2274 = scalar_select %p2273, %s20, 1
      %p2275 = scmp.lt.s32.totalorder %s19, 0
      %s2276 = scalar_select %p2275, %s19, 0
      %s2277 = smul.addr %s2274, 10
      %s2278 = sadd.s32 %s2276, %s2277
      %s2279 = smul.addr %s2278, 4
      %s2280 = scalar_lea.vmem %s4, %s2279
      // Predicated region
      $region37: #{tpu_custom_call.1} parent=35 // pred_check
        %p2281 = pneg %p153
      $region38: #{tpu_custom_call.1} parent=35 // pred_check_branch
        %2283 = sbr.rel (%p2281) target = $region40
      $region39: #{tpu_custom_call.1} parent=35 // pred_region
        _
      $region40: #{tpu_custom_call.1} parent=35 // pred_fallthru
        _
    $region36: #{tpu_custom_call.1} parent=5 // pred_fallthru
      _
    %p2284 = scmp.le.s32.totalorder 2, %s10
    // Predicated region
    $region41: #{tpu_custom_call.1} parent=5 // pred_check
      %p2285 = pneg %p2284
    $region42: #{tpu_custom_call.1} parent=5 // pred_check_branch
      %2287 = sbr.rel (%p2285) target = $region44
    $region43: #{tpu_custom_call.1} parent=5 // pred_region
      %s2288 = ssub.s32 %s10, 2
      // Predicated region
      $region45: #{tpu_custom_call.1} parent=43 // pred_check
        %p2289 = pneg %p159
      $region46: #{tpu_custom_call.1} parent=43 // pred_check_branch
        %2291 = sbr.rel (%p2289) target = $region48
      $region47: #{tpu_custom_call.1} parent=43 // pred_region
        %p2292 = scmp.lt.s32.totalorder %s22, 1
        %s2293 = scalar_select %p2292, %s22, 1
        %p2294 = scmp.lt.s32.totalorder %s21, 0
        %s2295 = scalar_select %p2294, %s21, 0
        %s2296 = smul.addr %s2293, 10
        %s2297 = sadd.s32 %s2295, %s2296
        %s2298 = smul.addr %s2297, 4
        %s2299 = scalar_lea.vmem %s4, %s2298
      $region48: #{tpu_custom_call.1} parent=43 // pred_fallthru
        _
    $region44: #{tpu_custom_call.1} parent=5 // pred_fallthru
      _
  $region6: #{tpu_custom_call.1} parent=0 // loop_footer
    %s14 = sadd.s32 1, %s10
  $region7: #{tpu_custom_call.1} parent=0 // loop_footer_branch
    %9 = sbr.rel target = $region3
  $region8: #{tpu_custom_call.1} parent=0 // loop_exit
    _

</llo_original>
